<compile_context>
chip_gen: v5e
topology: v5e:2x2
jax: 0.10.0
libtpu: 0.0.40
codegen_flags: <defaults>
</compile_context>

<pallas_src>
import functools

import jax
import jax.numpy as jnp
from jax.experimental import pallas as pl
from jax.experimental.pallas import tpu as pltpu

_EPS = 1e-5
_VMEM_LIMIT = 32 * 1024 * 1024  # safe scoped limit on v5e / v6e / v7x


def _dual_tensorcore_chip() -> bool:
    """True on chips with 2 TensorCores per device (v7x family)."""
    try:
        kind = jax.devices()[0].device_kind.lower()
    except Exception:
        return False
    return ("v7" in kind) or ("7x" in kind)


# ---------------------------------------------------------------------------
# In-kernel helpers / kernels
# ---------------------------------------------------------------------------

def _conv_rows_stats(apad, t_ref, H):
    """3x3 'same' conv on lane-folded, H-padded rows + lane-dense stats.

    apad  : [H+2, W*Cin] bf16 value (H already zero-padded; W/dx padding is
            encoded in the block-Toeplitz weights).
    t_ref : [3, W*Cin, W*Cout] bf16 block-Toeplitz weights (one per kernel row).
    Returns (acc [H, W*Cout] f32, stats [2, W*Cout] f32) where stats row 0 is
    the per-lane sum over H and row 1 the per-lane sum of squares.
    """
    # 3 big-K MXU matmuls (bf16 operands, f32 accumulation).
    acc = jnp.dot(apad[0:H], t_ref[0], preferred_element_type=jnp.float32)
    acc = acc + jnp.dot(apad[1:H + 1], t_ref[1],
                        preferred_element_type=jnp.float32)
    acc = acc + jnp.dot(apad[2:H + 2], t_ref[2],
                        preferred_element_type=jnp.float32)
    # TODO(synk): for row-blocked large-H variants, accumulate into a VMEM
    # scratch ref instead of this SSA chain to avoid vreg spills.

    # Lane-dense partial stats (sublane reduction only; the W-fold happens on
    # the host on a tiny [B, 2, W*Cout] array).
    col_sum = jnp.sum(acc, axis=0, keepdims=True)        # [1, W*Cout]
    col_sq = jnp.sum(acc * acc, axis=0, keepdims=True)   # [1, W*Cout]
    return acc, jnp.concatenate([col_sum, col_sq], axis=0)


def _conv_stats_kernel(xp_ref, t_ref, y_ref, stats_ref):
    """Stage-1: conv3x3 on pre-padded bf16 input + lane-dense per-channel stats."""
    b_blk, hp2, _ = xp_ref.shape
    H = hp2 - 2
    for b in range(b_blk):           # static unroll over the block's batch dim
        acc, stats = _conv_rows_stats(xp_ref[b], t_ref, H)
        y_ref[b] = acc
        stats_ref[b] = stats


def _act_conv_stats_kernel(x_ref, s_ref, sh_ref, t_ref, y_ref, stats_ref,
                           pad_ref):
    """Stage-2: fused (BN+FiLM affine + ReLU) -> conv3x3 + stats.

    The padded activation lives in a VMEM scratch whose halo rows are zeroed
    once; padding must happen AFTER the affine+ReLU (affine(0) != 0).
    """
    b_blk, H, wcin = x_ref.shape
    zero_row = jnp.zeros((1, wcin), jnp.float32)
    pad_ref[0:1, :] = zero_row
    pad_ref[H + 1:H + 2, :] = zero_row
    for b in range(b_blk):
        a = jnp.maximum(x_ref[b] * s_ref[b] + sh_ref[b], 0.0)   # [H, W*Cin] f32
        pad_ref[1:H + 1, :] = a
        apad = pad_ref[...].astype(jnp.bfloat16)                 # cast once
        acc, stats = _conv_rows_stats(apad, t_ref, H)
        y_ref[b] = acc
        stats_ref[b] = stats


# ---------------------------------------------------------------------------
# pallas_call wrappers
# ---------------------------------------------------------------------------

def _batch_spec(shape, b_blk):
    """[B, d1, d2] arrays blocked (b_blk, d1, d2) along the batch grid axis."""
    return pl.BlockSpec((b_blk,) + tuple(shape[1:]), lambda i: (i, 0, 0))


def _const_spec(shape):
    """Full-array block, constant across grid steps (the Toeplitz weights)."""
    return pl.BlockSpec(tuple(shape), lambda i: (0, 0, 0))


def conv1_stage(xpad_bf16, t_mats, b_blk):
    """Stage-1 conv + stats. xpad_bf16: [B, H+2, W*Cin] bf16 (pre-padded)."""
    B, hp2, _ = xpad_bf16.shape
    H = hp2 - 2
    wcout = t_mats.shape[-1]
    return pl.pallas_call(
        _conv_stats_kernel,
        out_shape=(jax.ShapeDtypeStruct((B, H, wcout), jnp.float32),
                   jax.ShapeDtypeStruct((B, 2, wcout), jnp.float32)),
        grid=(B // b_blk,),
        in_specs=[_batch_spec(xpad_bf16.shape, b_blk),
                  _const_spec(t_mats.shape)],
        out_specs=(_batch_spec((B, H, wcout), b_blk),
                   _batch_spec((B, 2, wcout), b_blk)),
        compiler_params=pltpu.CompilerParams(
            dimension_semantics=("parallel",),
            vmem_limit_bytes=_VMEM_LIMIT),
    )(xpad_bf16, t_mats)


def conv2_stage(y1, scale_row, shift_row, t_mats, b_blk):
    """Stage-2: fused stage-1 affine+ReLU -> conv + stats.  y1: [B, H, W*Cmid] f32."""
    B, H, wcin = y1.shape
    wcout = t_mats.shape[-1]
    return pl.pallas_call(
        _act_conv_stats_kernel,
        out_shape=(jax.ShapeDtypeStruct((B, H, wcout), jnp.float32),
                   jax.ShapeDtypeStruct((B, 2, wcout), jnp.float32)),
        grid=(B // b_blk,),
        in_specs=[_batch_spec(y1.shape, b_blk),
                  _batch_spec(scale_row.shape, b_blk),
                  _batch_spec(shift_row.shape, b_blk),
                  _const_spec(t_mats.shape)],
        out_specs=(_batch_spec((B, H, wcout), b_blk),
                   _batch_spec((B, 2, wcout), b_blk)),
        scratch_shapes=[pltpu.VMEM((H + 2, wcin), jnp.float32)],
        compiler_params=pltpu.CompilerParams(
            dimension_semantics=("parallel",),
            vmem_limit_bytes=_VMEM_LIMIT),
    )(y1, scale_row, shift_row, t_mats)


# ---------------------------------------------------------------------------
# Host-side (plain JAX) helpers
# ---------------------------------------------------------------------------

def build_toeplitz(w_hwio, W):
    """[3,3,Cin,Cout] HWIO conv weight -> [3, W*Cin, W*Cout] bf16 block-Toeplitz.

    T[ky][wi*Cin+ci, wo*Cout+co] = w[ky, wi-wo+1, ci, co] (zero outside the
    3-tap band), which also encodes the zero padding along W.
    """
    KH, KW, _, _ = w_hwio.shape
    mats = []
    for ky in range(KH):
        t = None
        for kx in range(KW):
            band = jnp.kron(jnp.eye(W, k=1 - kx, dtype=w_hwio.dtype),
                            w_hwio[ky, kx])
            t = band if t is None else t + band
        mats.append(t)
    return jnp.stack(mats, axis=0).astype(jnp.bfloat16)


def fused_bn_film_affine(stats, n_elems, bn_g, bn_b, cond, w1, b1, w2, b2,
                         C, W):
    """Fold BN(batch stats) + FiLM into one per-(b, c) scale/shift.

    stats: [B, 2, W*C] lane-dense per-batch partial (sum, sumsq) from the
    kernel; the W fold and everything else here is tiny and XLA-fused.
    Returns (scale, shift): [B, C] each.
    """
    tot = jnp.sum(stats, axis=0).reshape(2, W, C).sum(axis=1)   # [2, C]
    mean = tot[0] / n_elems
    # TODO(synk): E[x^2]-mean^2 is fine in f32 at this scale; use mean-shifted
    # accumulation if B*H*W or activation magnitudes grow a lot.
    var = jnp.maximum(tot[1] / n_elems - mean * mean, 0.0)       # biased var
    inv = jax.lax.rsqrt(var + _EPS)

    # FiLM generator MLP (tiny; plain JAX).
    h = jnp.maximum(cond @ w1 + b1, 0.0)
    fp = h @ w2 + b2
    gamma, beta = fp[:, :C], fp[:, C:]

    scale = gamma * (bn_g * inv)[None, :]                         # [B, C]
    shift = gamma * (bn_b - mean * inv * bn_g)[None, :] + beta    # [B, C]
    return scale, shift


def _lane_rows(per_channel, W):
    """[B, C] per-channel values -> [B, 1, W*C] lane-tiled broadcast rows."""
    B, C = per_channel.shape
    return jnp.tile(per_channel, (1, W)).reshape(B, 1, W * C)


@functools.partial(jax.jit, static_argnames=("b_blk",))
def _forward(x_nchw, condition, params, b_blk):
    B, Cin, H, W = x_nchw.shape
    Cmid = params["conv1_w"].shape[-1]
    Cout = params["conv2_w"].shape[-1]
    n_elems = B * H * W

    # NCHW -> lane-dense rows [B, H, W*Cin], pre-padded along H, cast to bf16
    # (all fused by XLA into one relayout pass; halves the stage-1 input DMA).
    x_rows = jnp.transpose(x_nchw, (0, 2, 3, 1)).reshape(B, H, W * Cin)
    xpad = jnp.pad(x_rows, ((0, 0), (1, 1), (0, 0))).astype(jnp.bfloat16)

    t1 = build_toeplitz(params["conv1_w"], W)   # bf16
    t2 = build_toeplitz(params["conv2_w"], W)   # bf16

    # ---- stage 1: conv + stats ----
    y1, stats1 = conv1_stage(xpad, t1, b_blk)
    sc1, sh1 = fused_bn_film_affine(
        stats1, n_elems, params["bn1_gamma"], params["bn1_beta"], condition,
        params["film1_w1"], params["film1_b1"],
        params["film1_w2"], params["film1_b2"], Cmid, W)

    # ---- stage 2: (stage-1 affine+ReLU fused in) conv + stats ----
    y2, stats2 = conv2_stage(y1, _lane_rows(sc1, W), _lane_rows(sh1, W),
                             t2, b_blk)
    sc2, sh2 = fused_bn_film_affine(
        stats2, n_elems, params["bn2_gamma"], params["bn2_beta"], condition,
        params["film2_w1"], params["film2_b1"],
        params["film2_w2"], params["film2_b2"], Cout, W)

    # ---- final BN+FiLM affine + ReLU: plain jnp, fused by XLA with the
    # output reshape/transpose (no extra pallas dispatch / HBM round trip) ----
    y2_nhwc = y2.reshape(B, H, W, Cout)
    out = jnp.maximum(y2_nhwc * sc2[:, None, None, :] + sh2[:, None, None, :],
                      0.0)
    return jnp.transpose(out, (0, 3, 1, 2))     # -> NCHW


def film_double_conv_block(x_nchw, condition, params):
    """Full FiLMDoubleConvBlock forward.  x_nchw: [B, Cin, H, W] (PyTorch layout)."""
    B = x_nchw.shape[0]
    # Single-TC chips (v5e/v6e): collapse the batch grid to one step (unrolled
    # loop over B inside the kernel).  Dual-TC v7x: keep grid=(B,) "parallel"
    # so both TensorCores get a batch element.
    b_blk = 1 if (_dual_tensorcore_chip() and B > 1) else B
    return _forward(x_nchw, condition, params, b_blk)


# ---------------------------------------------------------------------------
# Pure-JAX reference for correctness check
# ---------------------------------------------------------------------------

def _ref_stage(x_nhwc, w_hwio, bn_g, bn_b, cond, fw1, fb1, fw2, fb2):
    Cout = w_hwio.shape[-1]
    y = jax.lax.conv_general_dilated(
        x_nhwc, w_hwio, window_strides=(1, 1), padding="SAME",
        dimension_numbers=("NHWC", "HWIO", "NHWC"))
    mean = jnp.mean(y, axis=(0, 1, 2), keepdims=True)
    var = jnp.mean((y - mean) ** 2, axis=(0, 1, 2), keepdims=True)
    y = (y - mean) / jnp.sqrt(var + _EPS) * bn_g + bn_b
    h = jnp.maximum(cond @ fw1 + fb1, 0.0)
    fp = h @ fw2 + fb2
    gamma, beta = fp[:, :Cout], fp[:, Cout:]
    y = gamma[:, None, None, :] * y + beta[:, None, None, :]
    return jnp.maximum(y, 0.0)


def reference_forward(x_nchw, cond, p):
    x = jnp.transpose(x_nchw, (0, 2, 3, 1))
    x = _ref_stage(x, p["conv1_w"], p["bn1_gamma"], p["bn1_beta"], cond,
                   p["film1_w1"], p["film1_b1"], p["film1_w2"], p["film1_b2"])
    x = _ref_stage(x, p["conv2_w"], p["bn2_gamma"], p["bn2_beta"], cond,
                   p["film2_w1"], p["film2_b1"], p["film2_w2"], p["film2_b2"])
    return jnp.transpose(x, (0, 3, 1, 2))


# ---------------------------------------------------------------------------
# Deterministic parameter construction
# ---------------------------------------------------------------------------

def make_params(key, in_ch, mid_ch, out_ch, cond_size):
    # NOTE: the PyTorch module zero-inits the FiLM output layer; here we use
    # small deterministic random weights instead so the kernel path is
    # actually exercised (semantics identical, only init values differ).
    ks = jax.random.split(key, 10)
    hid1 = max(cond_size, mid_ch)
    hid2 = max(cond_size, out_ch)

    def nrm(k, shape, scale=0.1):
        return (scale * jax.random.normal(k, shape)).astype(jnp.float32)

    return {
        # conv weights in HWIO: [3, 3, Cin, Cout]
        "conv1_w": nrm(ks[0], (3, 3, in_ch, mid_ch)),
        "bn1_gamma": jnp.ones((mid_ch,), jnp.float32),
        "bn1_beta": jnp.zeros((mid_ch,), jnp.float32),
        "film1_w1": nrm(ks[1], (cond_size, hid1)),
        "film1_b1": nrm(ks[2], (hid1,)),
        "film1_w2": nrm(ks[3], (hid1, 2 * mid_ch)),
        "film1_b2": nrm(ks[4], (2 * mid_ch,)),
        "conv2_w": nrm(ks[5], (3, 3, mid_ch, out_ch)),
        "bn2_gamma": jnp.ones((out_ch,), jnp.float32),
        "bn2_beta": jnp.zeros((out_ch,), jnp.float32),
        "film2_w1": nrm(ks[6], (cond_size, hid2)),
        "film2_b1": nrm(ks[7], (hid2,)),
        "film2_w2": nrm(ks[8], (hid2, 2 * out_ch)),
        "film2_b2": nrm(ks[9], (2 * out_ch,)),
    }


if __name__ == "__main__":
    B, Cin, H, W = 2, 4, 16, 16
    Cout, Cmid = 8, 8          # mid_channels defaults to out_channels
    cond_size = 8

    key = jax.random.PRNGKey(0)
    kx, kc, kp = jax.random.split(key, 3)
    x = jax.random.normal(kx, (B, Cin, H, W), dtype=jnp.float32)
    condition = jax.random.normal(kc, (B, cond_size), dtype=jnp.float32)
    params = make_params(kp, Cin, Cmid, Cout, cond_size)

    out = film_double_conv_block(x, condition, params)
    out = jax.block_until_ready(out)

    ref = reference_forward(x, condition, params)
    assert out.shape == (B, Cout, H, W), out.shape
    assert bool(jnp.all(jnp.isfinite(out)))
    # Tolerance relaxed vs the f32 reference because the conv matmul operands
    # are bf16 (accumulation and all statistics remain f32).
    assert jnp.allclose(out, ref, rtol=3e-2, atol=3e-2), (
        float(jnp.max(jnp.abs(out - ref))))

    print("KERNEL_OK")
</pallas_src>

<mosaic_0001>
module attributes {stable_mosaic.version = 11 : i64} {
  func.func @_conv_stats_kernel(%arg0: i32, %arg1: memref<2x18x64xbf16, #tpu.memory_space<vmem>>, %arg2: memref<3x64x128xbf16, #tpu.memory_space<vmem>>, %arg3: memref<2x16x128xf32, #tpu.memory_space<vmem>>, %arg4: memref<2x2x128xf32, #tpu.memory_space<vmem>>) attributes {dimension_semantics = [#tpu.dimension_semantics<parallel>], iteration_bounds = array<i64: 1>, scalar_prefetch = 0 : i64, scratch_operands = 0 : i64, tpu.core_type = #tpu.core_type<tc>, window_params = [{transform_indices = @transform_0, window_bounds = array<i64: 2, 18, 64>}, {pipeline_mode = #tpu.pipeline_mode<synchronous>, transform_indices = @transform_1, window_bounds = array<i64: 3, 64, 128>}, {transform_indices = @transform_2, window_bounds = array<i64: 2, 16, 128>}, {transform_indices = @transform_3, window_bounds = array<i64: 2, 2, 128>}]} {
    %c0 = arith.constant 0 : index
    %c0_0 = arith.constant 0 : index
    %c0_1 = arith.constant 0 : index
    %0 = vector.load %arg1[%c0, %c0_0, %c0_1] : memref<2x18x64xbf16, #tpu.memory_space<vmem>>, vector<1x18x64xbf16>
    %1 = vector.shape_cast %0 : vector<1x18x64xbf16> to vector<18x64xbf16>
    %2 = vector.extract_strided_slice %1 {offsets = [0, 0], sizes = [16, 64], strides = [1, 1]} : vector<18x64xbf16> to vector<16x64xbf16>
    %c0_2 = arith.constant 0 : index
    %c0_3 = arith.constant 0 : index
    %c0_4 = arith.constant 0 : index
    %3 = vector.load %arg2[%c0_2, %c0_3, %c0_4] : memref<3x64x128xbf16, #tpu.memory_space<vmem>>, vector<1x64x128xbf16>
    %4 = vector.shape_cast %3 : vector<1x64x128xbf16> to vector<64x128xbf16>
    %cst = arith.constant dense<0.000000e+00> : vector<16x128xf32>
    %5 = tpu.matmul %2, %4, %cst {dimension_numbers = #tpu.dot_dimension_numbers<[1], [0], [0], [1], [0, 0, 1, 1], [], []>} : vector<16x64xbf16>, vector<64x128xbf16>, vector<16x128xf32> -> vector<16x128xf32>
    %6 = vector.extract_strided_slice %1 {offsets = [1, 0], sizes = [16, 64], strides = [1, 1]} : vector<18x64xbf16> to vector<16x64xbf16>
    %c1 = arith.constant 1 : index
    %c0_5 = arith.constant 0 : index
    %c0_6 = arith.constant 0 : index
    %7 = vector.load %arg2[%c1, %c0_5, %c0_6] : memref<3x64x128xbf16, #tpu.memory_space<vmem>>, vector<1x64x128xbf16>
    %8 = vector.shape_cast %7 : vector<1x64x128xbf16> to vector<64x128xbf16>
    %cst_7 = arith.constant dense<0.000000e+00> : vector<16x128xf32>
    %9 = tpu.matmul %6, %8, %cst_7 {dimension_numbers = #tpu.dot_dimension_numbers<[1], [0], [0], [1], [0, 0, 1, 1], [], []>} : vector<16x64xbf16>, vector<64x128xbf16>, vector<16x128xf32> -> vector<16x128xf32>
    %10 = arith.addf %5, %9 : vector<16x128xf32>
    %11 = vector.extract_strided_slice %1 {offsets = [2, 0], sizes = [16, 64], strides = [1, 1]} : vector<18x64xbf16> to vector<16x64xbf16>
    %c2 = arith.constant 2 : index
    %c0_8 = arith.constant 0 : index
    %c0_9 = arith.constant 0 : index
    %12 = vector.load %arg2[%c2, %c0_8, %c0_9] : memref<3x64x128xbf16, #tpu.memory_space<vmem>>, vector<1x64x128xbf16>
    %13 = vector.shape_cast %12 : vector<1x64x128xbf16> to vector<64x128xbf16>
    %cst_10 = arith.constant dense<0.000000e+00> : vector<16x128xf32>
    %14 = tpu.matmul %11, %13, %cst_10 {dimension_numbers = #tpu.dot_dimension_numbers<[1], [0], [0], [1], [0, 0, 1, 1], [], []>} : vector<16x64xbf16>, vector<64x128xbf16>, vector<16x128xf32> -> vector<16x128xf32>
    %15 = arith.addf %10, %14 : vector<16x128xf32>
    %cst_11 = arith.constant dense<0.000000e+00> : vector<128xf32>
    %16 = vector.multi_reduction <add>, %15, %cst_11 [0] : vector<16x128xf32> to vector<128xf32>
    %17 = vector.shape_cast %16 : vector<128xf32> to vector<1x128xf32>
    %18 = arith.mulf %15, %15 : vector<16x128xf32>
    %cst_12 = arith.constant dense<0.000000e+00> : vector<128xf32>
    %19 = vector.multi_reduction <add>, %18, %cst_12 [0] : vector<16x128xf32> to vector<128xf32>
    %20 = vector.shape_cast %19 : vector<128xf32> to vector<1x128xf32>
    %21 = tpu.concatenate %17, %20 in 0 : vector<1x128xf32>, vector<1x128xf32> -> vector<2x128xf32>
    %c0_13 = arith.constant 0 : index
    %c0_14 = arith.constant 0 : index
    %c0_15 = arith.constant 0 : index
    %22 = vector.load %arg3[%c0_13, %c0_14, %c0_15] : memref<2x16x128xf32, #tpu.memory_space<vmem>>, vector<1x16x128xf32>
    %23 = vector.shape_cast %22 : vector<1x16x128xf32> to vector<16x128xf32>
    %24 = vector.shape_cast %15 : vector<16x128xf32> to vector<1x16x128xf32>
    tpu.vector_store %arg3[%c0_13, %c0_14, %c0_15], %24 {strides = array<i32>} : memref<2x16x128xf32, #tpu.memory_space<vmem>>, vector<1x16x128xf32>,
    %c0_16 = arith.constant 0 : index
    %c0_17 = arith.constant 0 : index
    %c0_18 = arith.constant 0 : index
    %25 = vector.load %arg4[%c0_16, %c0_17, %c0_18] : memref<2x2x128xf32, #tpu.memory_space<vmem>>, vector<1x2x128xf32>
    %26 = vector.shape_cast %25 : vector<1x2x128xf32> to vector<2x128xf32>
    %27 = vector.shape_cast %21 : vector<2x128xf32> to vector<1x2x128xf32>
    tpu.vector_store %arg4[%c0_16, %c0_17, %c0_18], %27 {strides = array<i32>} : memref<2x2x128xf32, #tpu.memory_space<vmem>>, vector<1x2x128xf32>,
    %c1_19 = arith.constant 1 : index
    %c0_20 = arith.constant 0 : index
    %c0_21 = arith.constant 0 : index
    %28 = vector.load %arg1[%c1_19, %c0_20, %c0_21] : memref<2x18x64xbf16, #tpu.memory_space<vmem>>, vector<1x18x64xbf16>
    %29 = vector.shape_cast %28 : vector<1x18x64xbf16> to vector<18x64xbf16>
    %30 = vector.extract_strided_slice %29 {offsets = [0, 0], sizes = [16, 64], strides = [1, 1]} : vector<18x64xbf16> to vector<16x64xbf16>
    %c0_22 = arith.constant 0 : index
    %c0_23 = arith.constant 0 : index
    %c0_24 = arith.constant 0 : index
    %31 = vector.load %arg2[%c0_22, %c0_23, %c0_24] : memref<3x64x128xbf16, #tpu.memory_space<vmem>>, vector<1x64x128xbf16>
    %32 = vector.shape_cast %31 : vector<1x64x128xbf16> to vector<64x128xbf16>
    %cst_25 = arith.constant dense<0.000000e+00> : vector<16x128xf32>
    %33 = tpu.matmul %30, %32, %cst_25 {dimension_numbers = #tpu.dot_dimension_numbers<[1], [0], [0], [1], [0, 0, 1, 1], [], []>} : vector<16x64xbf16>, vector<64x128xbf16>, vector<16x128xf32> -> vector<16x128xf32>
    %34 = vector.extract_strided_slice %29 {offsets = [1, 0], sizes = [16, 64], strides = [1, 1]} : vector<18x64xbf16> to vector<16x64xbf16>
    %c1_26 = arith.constant 1 : index
    %c0_27 = arith.constant 0 : index
    %c0_28 = arith.constant 0 : index
    %35 = vector.load %arg2[%c1_26, %c0_27, %c0_28] : memref<3x64x128xbf16, #tpu.memory_space<vmem>>, vector<1x64x128xbf16>
    %36 = vector.shape_cast %35 : vector<1x64x128xbf16> to vector<64x128xbf16>
    %cst_29 = arith.constant dense<0.000000e+00> : vector<16x128xf32>
    %37 = tpu.matmul %34, %36, %cst_29 {dimension_numbers = #tpu.dot_dimension_numbers<[1], [0], [0], [1], [0, 0, 1, 1], [], []>} : vector<16x64xbf16>, vector<64x128xbf16>, vector<16x128xf32> -> vector<16x128xf32>
    %38 = arith.addf %33, %37 : vector<16x128xf32>
    %39 = vector.extract_strided_slice %29 {offsets = [2, 0], sizes = [16, 64], strides = [1, 1]} : vector<18x64xbf16> to vector<16x64xbf16>
    %c2_30 = arith.constant 2 : index
    %c0_31 = arith.constant 0 : index
    %c0_32 = arith.constant 0 : index
    %40 = vector.load %arg2[%c2_30, %c0_31, %c0_32] : memref<3x64x128xbf16, #tpu.memory_space<vmem>>, vector<1x64x128xbf16>
    %41 = vector.shape_cast %40 : vector<1x64x128xbf16> to vector<64x128xbf16>
    %cst_33 = arith.constant dense<0.000000e+00> : vector<16x128xf32>
    %42 = tpu.matmul %39, %41, %cst_33 {dimension_numbers = #tpu.dot_dimension_numbers<[1], [0], [0], [1], [0, 0, 1, 1], [], []>} : vector<16x64xbf16>, vector<64x128xbf16>, vector<16x128xf32> -> vector<16x128xf32>
    %43 = arith.addf %38, %42 : vector<16x128xf32>
    %cst_34 = arith.constant dense<0.000000e+00> : vector<128xf32>
    %44 = vector.multi_reduction <add>, %43, %cst_34 [0] : vector<16x128xf32> to vector<128xf32>
    %45 = vector.shape_cast %44 : vector<128xf32> to vector<1x128xf32>
    %46 = arith.mulf %43, %43 : vector<16x128xf32>
    %cst_35 = arith.constant dense<0.000000e+00> : vector<128xf32>
    %47 = vector.multi_reduction <add>, %46, %cst_35 [0] : vector<16x128xf32> to vector<128xf32>
    %48 = vector.shape_cast %47 : vector<128xf32> to vector<1x128xf32>
    %49 = tpu.concatenate %45, %48 in 0 : vector<1x128xf32>, vector<1x128xf32> -> vector<2x128xf32>
    %c1_36 = arith.constant 1 : index
    %c0_37 = arith.constant 0 : index
    %c0_38 = arith.constant 0 : index
    %50 = vector.load %arg3[%c1_36, %c0_37, %c0_38] : memref<2x16x128xf32, #tpu.memory_space<vmem>>, vector<1x16x128xf32>
    %51 = vector.shape_cast %50 : vector<1x16x128xf32> to vector<16x128xf32>
    %52 = vector.shape_cast %43 : vector<16x128xf32> to vector<1x16x128xf32>
    tpu.vector_store %arg3[%c1_36, %c0_37, %c0_38], %52 {strides = array<i32>} : memref<2x16x128xf32, #tpu.memory_space<vmem>>, vector<1x16x128xf32>,
    %c1_39 = arith.constant 1 : index
    %c0_40 = arith.constant 0 : index
    %c0_41 = arith.constant 0 : index
    %53 = vector.load %arg4[%c1_39, %c0_40, %c0_41] : memref<2x2x128xf32, #tpu.memory_space<vmem>>, vector<1x2x128xf32>
    %54 = vector.shape_cast %53 : vector<1x2x128xf32> to vector<2x128xf32>
    %55 = vector.shape_cast %49 : vector<2x128xf32> to vector<1x2x128xf32>
    tpu.vector_store %arg4[%c1_39, %c0_40, %c0_41], %55 {strides = array<i32>} : memref<2x2x128xf32, #tpu.memory_space<vmem>>, vector<1x2x128xf32>,
    return
  }
  func.func @transform_0(%arg0: i32) -> (i32, i32, i32) {
    %c0_i32 = arith.constant 0 : i32
    %c0_i32_0 = arith.constant 0 : i32
    %c0_i32_1 = arith.constant 0 : i32
    return %arg0, %c0_i32, %c0_i32_0 : i32, i32, i32
  }
  func.func @transform_1(%arg0: i32) -> (i32, i32, i32) {
    %c0_i32 = arith.constant 0 : i32
    %c0_i32_0 = arith.constant 0 : i32
    %c0_i32_1 = arith.constant 0 : i32
    %c0_i32_2 = arith.constant 0 : i32
    return %c0_i32, %c0_i32_0, %c0_i32_1 : i32, i32, i32
  }
  func.func @transform_2(%arg0: i32) -> (i32, i32, i32) {
    %c0_i32 = arith.constant 0 : i32
    %c0_i32_0 = arith.constant 0 : i32
    %c0_i32_1 = arith.constant 0 : i32
    return %arg0, %c0_i32, %c0_i32_0 : i32, i32, i32
  }
  func.func @transform_3(%arg0: i32) -> (i32, i32, i32) {
    %c0_i32 = arith.constant 0 : i32
    %c0_i32_0 = arith.constant 0 : i32
    %c0_i32_1 = arith.constant 0 : i32
    return %arg0, %c0_i32, %c0_i32_0 : i32, i32, i32
  }
}

module attributes {stable_mosaic.version = 11 : i64} {
  func.func @_act_conv_stats_kernel(%arg0: i32, %arg1: memref<2x16x128xf32, #tpu.memory_space<vmem>>, %arg2: memref<2x1x128xf32, #tpu.memory_space<vmem>>, %arg3: memref<2x1x128xf32, #tpu.memory_space<vmem>>, %arg4: memref<3x128x128xbf16, #tpu.memory_space<vmem>>, %arg5: memref<2x16x128xf32, #tpu.memory_space<vmem>>, %arg6: memref<2x2x128xf32, #tpu.memory_space<vmem>>, %arg7: memref<18x128xf32, #tpu.memory_space<vmem>>) attributes {dimension_semantics = [#tpu.dimension_semantics<parallel>], iteration_bounds = array<i64: 1>, scalar_prefetch = 0 : i64, scratch_operands = 1 : i64, tpu.core_type = #tpu.core_type<tc>, window_params = [{transform_indices = @transform_0, window_bounds = array<i64: 2, 16, 128>}, {transform_indices = @transform_1, window_bounds = array<i64: 2, 1, 128>}, {transform_indices = @transform_2, window_bounds = array<i64: 2, 1, 128>}, {pipeline_mode = #tpu.pipeline_mode<synchronous>, transform_indices = @transform_3, window_bounds = array<i64: 3, 128, 128>}, {transform_indices = @transform_4, window_bounds = array<i64: 2, 16, 128>}, {transform_indices = @transform_5, window_bounds = array<i64: 2, 2, 128>}]} {
    %cst = arith.constant 0.000000e+00 : f32
    %0 = vector.broadcast %cst : f32 to vector<1x128xf32>
    %c0 = arith.constant 0 : index
    %c0_0 = arith.constant 0 : index
    %1 = vector.load %arg7[%c0, %c0_0] : memref<18x128xf32, #tpu.memory_space<vmem>>, vector<1x128xf32>
    tpu.vector_store %arg7[%c0, %c0_0], %0 {strides = array<i32>} : memref<18x128xf32, #tpu.memory_space<vmem>>, vector<1x128xf32>,
    %c17 = arith.constant 17 : index
    %c0_1 = arith.constant 0 : index
    %2 = vector.load %arg7[%c17, %c0_1] : memref<18x128xf32, #tpu.memory_space<vmem>>, vector<1x128xf32>
    tpu.vector_store %arg7[%c17, %c0_1], %0 {strides = array<i32>} : memref<18x128xf32, #tpu.memory_space<vmem>>, vector<1x128xf32>,
    %c0_2 = arith.constant 0 : index
    %c0_3 = arith.constant 0 : index
    %c0_4 = arith.constant 0 : index
    %3 = vector.load %arg1[%c0_2, %c0_3, %c0_4] : memref<2x16x128xf32, #tpu.memory_space<vmem>>, vector<1x16x128xf32>
    %4 = vector.shape_cast %3 : vector<1x16x128xf32> to vector<16x128xf32>
    %c0_5 = arith.constant 0 : index
    %c0_6 = arith.constant 0 : index
    %c0_7 = arith.constant 0 : index
    %5 = vector.load %arg2[%c0_5, %c0_6, %c0_7] : memref<2x1x128xf32, #tpu.memory_space<vmem>>, vector<1x1x128xf32>
    %6 = vector.shape_cast %5 : vector<1x1x128xf32> to vector<1x128xf32>
    %7 = vector.broadcast %6 : vector<1x128xf32> to vector<16x128xf32>
    %8 = arith.mulf %4, %7 : vector<16x128xf32>
    %c0_8 = arith.constant 0 : index
    %c0_9 = arith.constant 0 : index
    %c0_10 = arith.constant 0 : index
    %9 = vector.load %arg3[%c0_8, %c0_9, %c0_10] : memref<2x1x128xf32, #tpu.memory_space<vmem>>, vector<1x1x128xf32>
    %10 = vector.shape_cast %9 : vector<1x1x128xf32> to vector<1x128xf32>
    %11 = vector.broadcast %10 : vector<1x128xf32> to vector<16x128xf32>
    %12 = arith.addf %8, %11 : vector<16x128xf32>
    %cst_11 = arith.constant 0.000000e+00 : f32
    %13 = vector.broadcast %cst_11 : f32 to vector<16x128xf32>
    %14 = arith.maximumf %12, %13 : vector<16x128xf32>
    %c1 = arith.constant 1 : index
    %c0_12 = arith.constant 0 : index
    %15 = vector.load %arg7[%c1, %c0_12] : memref<18x128xf32, #tpu.memory_space<vmem>>, vector<16x128xf32>
    tpu.vector_store %arg7[%c1, %c0_12], %14 {strides = array<i32>} : memref<18x128xf32, #tpu.memory_space<vmem>>, vector<16x128xf32>,
    %c0_13 = arith.constant 0 : index
    %c0_14 = arith.constant 0 : index
    %16 = vector.load %arg7[%c0_13, %c0_14] : memref<18x128xf32, #tpu.memory_space<vmem>>, vector<18x128xf32>
    %17 = arith.truncf %16 : vector<18x128xf32> to vector<18x128xbf16>
    %18 = vector.extract_strided_slice %17 {offsets = [0, 0], sizes = [16, 128], strides = [1, 1]} : vector<18x128xbf16> to vector<16x128xbf16>
    %c0_15 = arith.constant 0 : index
    %c0_16 = arith.constant 0 : index
    %c0_17 = arith.constant 0 : index
    %19 = vector.load %arg4[%c0_15, %c0_16, %c0_17] : memref<3x128x128xbf16, #tpu.memory_space<vmem>>, vector<1x128x128xbf16>
    %20 = vector.shape_cast %19 : vector<1x128x128xbf16> to vector<128x128xbf16>
    %cst_18 = arith.constant dense<0.000000e+00> : vector<16x128xf32>
    %21 = tpu.matmul %18, %20, %cst_18 {dimension_numbers = #tpu.dot_dimension_numbers<[1], [0], [0], [1], [0, 0, 1, 1], [], []>} : vector<16x128xbf16>, vector<128x128xbf16>, vector<16x128xf32> -> vector<16x128xf32>
    %22 = vector.extract_strided_slice %17 {offsets = [1, 0], sizes = [16, 128], strides = [1, 1]} : vector<18x128xbf16> to vector<16x128xbf16>
    %c1_19 = arith.constant 1 : index
    %c0_20 = arith.constant 0 : index
    %c0_21 = arith.constant 0 : index
    %23 = vector.load %arg4[%c1_19, %c0_20, %c0_21] : memref<3x128x128xbf16, #tpu.memory_space<vmem>>, vector<1x128x128xbf16>
    %24 = vector.shape_cast %23 : vector<1x128x128xbf16> to vector<128x128xbf16>
    %cst_22 = arith.constant dense<0.000000e+00> : vector<16x128xf32>
    %25 = tpu.matmul %22, %24, %cst_22 {dimension_numbers = #tpu.dot_dimension_numbers<[1], [0], [0], [1], [0, 0, 1, 1], [], []>} : vector<16x128xbf16>, vector<128x128xbf16>, vector<16x128xf32> -> vector<16x128xf32>
    %26 = arith.addf %21, %25 : vector<16x128xf32>
    %27 = vector.extract_strided_slice %17 {offsets = [2, 0], sizes = [16, 128], strides = [1, 1]} : vector<18x128xbf16> to vector<16x128xbf16>
    %c2 = arith.constant 2 : index
    %c0_23 = arith.constant 0 : index
    %c0_24 = arith.constant 0 : index
    %28 = vector.load %arg4[%c2, %c0_23, %c0_24] : memref<3x128x128xbf16, #tpu.memory_space<vmem>>, vector<1x128x128xbf16>
    %29 = vector.shape_cast %28 : vector<1x128x128xbf16> to vector<128x128xbf16>
    %cst_25 = arith.constant dense<0.000000e+00> : vector<16x128xf32>
    %30 = tpu.matmul %27, %29, %cst_25 {dimension_numbers = #tpu.dot_dimension_numbers<[1], [0], [0], [1], [0, 0, 1, 1], [], []>} : vector<16x128xbf16>, vector<128x128xbf16>, vector<16x128xf32> -> vector<16x128xf32>
    %31 = arith.addf %26, %30 : vector<16x128xf32>
    %cst_26 = arith.constant dense<0.000000e+00> : vector<128xf32>
    %32 = vector.multi_reduction <add>, %31, %cst_26 [0] : vector<16x128xf32> to vector<128xf32>
    %33 = vector.shape_cast %32 : vector<128xf32> to vector<1x128xf32>
    %34 = arith.mulf %31, %31 : vector<16x128xf32>
    %cst_27 = arith.constant dense<0.000000e+00> : vector<128xf32>
    %35 = vector.multi_reduction <add>, %34, %cst_27 [0] : vector<16x128xf32> to vector<128xf32>
    %36 = vector.shape_cast %35 : vector<128xf32> to vector<1x128xf32>
    %37 = tpu.concatenate %33, %36 in 0 : vector<1x128xf32>, vector<1x128xf32> -> vector<2x128xf32>
    %c0_28 = arith.constant 0 : index
    %c0_29 = arith.constant 0 : index
    %c0_30 = arith.constant 0 : index
    %38 = vector.load %arg5[%c0_28, %c0_29, %c0_30] : memref<2x16x128xf32, #tpu.memory_space<vmem>>, vector<1x16x128xf32>
    %39 = vector.shape_cast %38 : vector<1x16x128xf32> to vector<16x128xf32>
    %40 = vector.shape_cast %31 : vector<16x128xf32> to vector<1x16x128xf32>
    tpu.vector_store %arg5[%c0_28, %c0_29, %c0_30], %40 {strides = array<i32>} : memref<2x16x128xf32, #tpu.memory_space<vmem>>, vector<1x16x128xf32>,
    %c0_31 = arith.constant 0 : index
    %c0_32 = arith.constant 0 : index
    %c0_33 = arith.constant 0 : index
    %41 = vector.load %arg6[%c0_31, %c0_32, %c0_33] : memref<2x2x128xf32, #tpu.memory_space<vmem>>, vector<1x2x128xf32>
    %42 = vector.shape_cast %41 : vector<1x2x128xf32> to vector<2x128xf32>
    %43 = vector.shape_cast %37 : vector<2x128xf32> to vector<1x2x128xf32>
    tpu.vector_store %arg6[%c0_31, %c0_32, %c0_33], %43 {strides = array<i32>} : memref<2x2x128xf32, #tpu.memory_space<vmem>>, vector<1x2x128xf32>,
    %c1_34 = arith.constant 1 : index
    %c0_35 = arith.constant 0 : index
    %c0_36 = arith.constant 0 : index
    %44 = vector.load %arg1[%c1_34, %c0_35, %c0_36] : memref<2x16x128xf32, #tpu.memory_space<vmem>>, vector<1x16x128xf32>
    %45 = vector.shape_cast %44 : vector<1x16x128xf32> to vector<16x128xf32>
    %c1_37 = arith.constant 1 : index
    %c0_38 = arith.constant 0 : index
    %c0_39 = arith.constant 0 : index
    %46 = vector.load %arg2[%c1_37, %c0_38, %c0_39] : memref<2x1x128xf32, #tpu.memory_space<vmem>>, vector<1x1x128xf32>
    %47 = vector.shape_cast %46 : vector<1x1x128xf32> to vector<1x128xf32>
    %48 = vector.broadcast %47 : vector<1x128xf32> to vector<16x128xf32>
    %49 = arith.mulf %45, %48 : vector<16x128xf32>
    %c1_40 = arith.constant 1 : index
    %c0_41 = arith.constant 0 : index
    %c0_42 = arith.constant 0 : index
    %50 = vector.load %arg3[%c1_40, %c0_41, %c0_42] : memref<2x1x128xf32, #tpu.memory_space<vmem>>, vector<1x1x128xf32>
    %51 = vector.shape_cast %50 : vector<1x1x128xf32> to vector<1x128xf32>
    %52 = vector.broadcast %51 : vector<1x128xf32> to vector<16x128xf32>
    %53 = arith.addf %49, %52 : vector<16x128xf32>
    %cst_43 = arith.constant 0.000000e+00 : f32
    %54 = vector.broadcast %cst_43 : f32 to vector<16x128xf32>
    %55 = arith.maximumf %53, %54 : vector<16x128xf32>
    %c1_44 = arith.constant 1 : index
    %c0_45 = arith.constant 0 : index
    %56 = vector.load %arg7[%c1_44, %c0_45] : memref<18x128xf32, #tpu.memory_space<vmem>>, vector<16x128xf32>
    tpu.vector_store %arg7[%c1_44, %c0_45], %55 {strides = array<i32>} : memref<18x128xf32, #tpu.memory_space<vmem>>, vector<16x128xf32>,
    %c0_46 = arith.constant 0 : index
    %c0_47 = arith.constant 0 : index
    %57 = vector.load %arg7[%c0_46, %c0_47] : memref<18x128xf32, #tpu.memory_space<vmem>>, vector<18x128xf32>
    %58 = arith.truncf %57 : vector<18x128xf32> to vector<18x128xbf16>
    %59 = vector.extract_strided_slice %58 {offsets = [0, 0], sizes = [16, 128], strides = [1, 1]} : vector<18x128xbf16> to vector<16x128xbf16>
    %c0_48 = arith.constant 0 : index
    %c0_49 = arith.constant 0 : index
    %c0_50 = arith.constant 0 : index
    %60 = vector.load %arg4[%c0_48, %c0_49, %c0_50] : memref<3x128x128xbf16, #tpu.memory_space<vmem>>, vector<1x128x128xbf16>
    %61 = vector.shape_cast %60 : vector<1x128x128xbf16> to vector<128x128xbf16>
    %cst_51 = arith.constant dense<0.000000e+00> : vector<16x128xf32>
    %62 = tpu.matmul %59, %61, %cst_51 {dimension_numbers = #tpu.dot_dimension_numbers<[1], [0], [0], [1], [0, 0, 1, 1], [], []>} : vector<16x128xbf16>, vector<128x128xbf16>, vector<16x128xf32> -> vector<16x128xf32>
    %63 = vector.extract_strided_slice %58 {offsets = [1, 0], sizes = [16, 128], strides = [1, 1]} : vector<18x128xbf16> to vector<16x128xbf16>
    %c1_52 = arith.constant 1 : index
    %c0_53 = arith.constant 0 : index
    %c0_54 = arith.constant 0 : index
    %64 = vector.load %arg4[%c1_52, %c0_53, %c0_54] : memref<3x128x128xbf16, #tpu.memory_space<vmem>>, vector<1x128x128xbf16>
    %65 = vector.shape_cast %64 : vector<1x128x128xbf16> to vector<128x128xbf16>
    %cst_55 = arith.constant dense<0.000000e+00> : vector<16x128xf32>
    %66 = tpu.matmul %63, %65, %cst_55 {dimension_numbers = #tpu.dot_dimension_numbers<[1], [0], [0], [1], [0, 0, 1, 1], [], []>} : vector<16x128xbf16>, vector<128x128xbf16>, vector<16x128xf32> -> vector<16x128xf32>
    %67 = arith.addf %62, %66 : vector<16x128xf32>
    %68 = vector.extract_strided_slice %58 {offsets = [2, 0], sizes = [16, 128], strides = [1, 1]} : vector<18x128xbf16> to vector<16x128xbf16>
    %c2_56 = arith.constant 2 : index
    %c0_57 = arith.constant 0 : index
    %c0_58 = arith.constant 0 : index
    %69 = vector.load %arg4[%c2_56, %c0_57, %c0_58] : memref<3x128x128xbf16, #tpu.memory_space<vmem>>, vector<1x128x128xbf16>
    %70 = vector.shape_cast %69 : vector<1x128x128xbf16> to vector<128x128xbf16>
    %cst_59 = arith.constant dense<0.000000e+00> : vector<16x128xf32>
    %71 = tpu.matmul %68, %70, %cst_59 {dimension_numbers = #tpu.dot_dimension_numbers<[1], [0], [0], [1], [0, 0, 1, 1], [], []>} : vector<16x128xbf16>, vector<128x128xbf16>, vector<16x128xf32> -> vector<16x128xf32>
    %72 = arith.addf %67, %71 : vector<16x128xf32>
    %cst_60 = arith.constant dense<0.000000e+00> : vector<128xf32>
    %73 = vector.multi_reduction <add>, %72, %cst_60 [0] : vector<16x128xf32> to vector<128xf32>
    %74 = vector.shape_cast %73 : vector<128xf32> to vector<1x128xf32>
    %75 = arith.mulf %72, %72 : vector<16x128xf32>
    %cst_61 = arith.constant dense<0.000000e+00> : vector<128xf32>
    %76 = vector.multi_reduction <add>, %75, %cst_61 [0] : vector<16x128xf32> to vector<128xf32>
    %77 = vector.shape_cast %76 : vector<128xf32> to vector<1x128xf32>
    %78 = tpu.concatenate %74, %77 in 0 : vector<1x128xf32>, vector<1x128xf32> -> vector<2x128xf32>
    %c1_62 = arith.constant 1 : index
    %c0_63 = arith.constant 0 : index
    %c0_64 = arith.constant 0 : index
    %79 = vector.load %arg5[%c1_62, %c0_63, %c0_64] : memref<2x16x128xf32, #tpu.memory_space<vmem>>, vector<1x16x128xf32>
    %80 = vector.shape_cast %79 : vector<1x16x128xf32> to vector<16x128xf32>
    %81 = vector.shape_cast %72 : vector<16x128xf32> to vector<1x16x128xf32>
    tpu.vector_store %arg5[%c1_62, %c0_63, %c0_64], %81 {strides = array<i32>} : memref<2x16x128xf32, #tpu.memory_space<vmem>>, vector<1x16x128xf32>,
    %c1_65 = arith.constant 1 : index
    %c0_66 = arith.constant 0 : index
    %c0_67 = arith.constant 0 : index
    %82 = vector.load %arg6[%c1_65, %c0_66, %c0_67] : memref<2x2x128xf32, #tpu.memory_space<vmem>>, vector<1x2x128xf32>
    %83 = vector.shape_cast %82 : vector<1x2x128xf32> to vector<2x128xf32>
    %84 = vector.shape_cast %78 : vector<2x128xf32> to vector<1x2x128xf32>
    tpu.vector_store %arg6[%c1_65, %c0_66, %c0_67], %84 {strides = array<i32>} : memref<2x2x128xf32, #tpu.memory_space<vmem>>, vector<1x2x128xf32>,
    return
  }
  func.func @transform_0(%arg0: i32) -> (i32, i32, i32) {
    %c0_i32 = arith.constant 0 : i32
    %c0_i32_0 = arith.constant 0 : i32
    %c0_i32_1 = arith.constant 0 : i32
    return %arg0, %c0_i32, %c0_i32_0 : i32, i32, i32
  }
  func.func @transform_1(%arg0: i32) -> (i32, i32, i32) {
    %c0_i32 = arith.constant 0 : i32
    %c0_i32_0 = arith.constant 0 : i32
    %c0_i32_1 = arith.constant 0 : i32
    return %arg0, %c0_i32, %c0_i32_0 : i32, i32, i32
  }
  func.func @transform_2(%arg0: i32) -> (i32, i32, i32) {
    %c0_i32 = arith.constant 0 : i32
    %c0_i32_0 = arith.constant 0 : i32
    %c0_i32_1 = arith.constant 0 : i32
    return %arg0, %c0_i32, %c0_i32_0 : i32, i32, i32
  }
  func.func @transform_3(%arg0: i32) -> (i32, i32, i32) {
    %c0_i32 = arith.constant 0 : i32
    %c0_i32_0 = arith.constant 0 : i32
    %c0_i32_1 = arith.constant 0 : i32
    %c0_i32_2 = arith.constant 0 : i32
    return %c0_i32, %c0_i32_0, %c0_i32_1 : i32, i32, i32
  }
  func.func @transform_4(%arg0: i32) -> (i32, i32, i32) {
    %c0_i32 = arith.constant 0 : i32
    %c0_i32_0 = arith.constant 0 : i32
    %c0_i32_1 = arith.constant 0 : i32
    return %arg0, %c0_i32, %c0_i32_0 : i32, i32, i32
  }
  func.func @transform_5(%arg0: i32) -> (i32, i32, i32) {
    %c0_i32 = arith.constant 0 : i32
    %c0_i32_0 = arith.constant 0 : i32
    %c0_i32_1 = arith.constant 0 : i32
    return %arg0, %c0_i32, %c0_i32_0 : i32, i32, i32
  }
}

</mosaic_0001>

<llo_original>
// kernel: _forward.2
$region0: #{_forward.2}
  #allocation0 [shape = 'u32[]', space=smem, size = 0x4, offset = 0x4, fixed_abs, tag = 'smem constant byte address 0x4 - core index']
  #allocation1 [shape = 'u32[72,128]{1,0:T(1,128)}', space=vmem, size = 0x9000, scoped, tag = 'internal scratch']
  %s0 = inlined_call_operand.vmem [shape: bf16[2,18,64], index: 0, kind: input, shape index: {}]
  %s1 = inlined_call_operand.vmem [shape: bf16[3,64,128], index: 1, kind: input, shape index: {}]
  %s2 = inlined_call_operand.vmem [shape: f32[2,16,128], index: 2, kind: output, shape index: {0}]
  %s3 = inlined_call_operand.vmem [shape: f32[2,2,128], index: 3, kind: output, shape index: {1}]
  %4 = xla_tuple %s2, %s3
  %s5 = sld [smem:[#allocation0]]
  $region26: #{_forward.2} parent=0
    _
  %s7 = ssub.s32 1, %s5
  %s8 = scalar_select 0, %s7, %s5
  // Predicated region
  $region2: #{_forward.2} parent=0 // pred_check
    _
  $region3: #{_forward.2} parent=0 // pred_check_branch
    %10 = sbr.rel (0) target = $region5
  $region4: #{_forward.2} parent=0 // pred_region
    _
  $region5: #{_forward.2} parent=0 // pred_fallthru
    _
  // Predicated region
  $region6: #{_forward.2} parent=0 // pred_check
    _
  $region7: #{_forward.2} parent=0 // pred_check_branch
    %12 = sbr.rel (0) target = $region9
  $region8: #{_forward.2} parent=0 // pred_region
    _
  $region9: #{_forward.2} parent=0 // pred_fallthru
    _
  %v14 = vld [vmem:[%s0] sm:$0xf]
  %v15 = vld [vmem:[%s0 + $0x4] sm:$0xf]
  %v16 = vld [vmem:[%s0 + $0x8] sm:$0x1]
  %v17 = vld [vmem:[%s1] sm:$0xf]
  %v18 = vld [vmem:[%s1 + $0x4] sm:$0xf]
  %v19 = vld [vmem:[%s1 + $0x8] sm:$0xf]
  %v20 = vld [vmem:[%s1 + $0xc] sm:$0xf]
  %v21 = vld [vmem:[%s1 + $0x10] sm:$0xf]
  %v22 = vld [vmem:[%s1 + $0x14] sm:$0xf]
  %v23 = vld [vmem:[%s1 + $0x18] sm:$0xf]
  %v24 = vld [vmem:[%s1 + $0x1c] sm:$0xf]
  %s25 = scalar_lea.vmem %s1, 32
  %v26 = vld [vmem:[%s25] sm:$0xf]
  %v27 = vld [vmem:[%s25 + $0x4] sm:$0xf]
  %v28 = vld [vmem:[%s25 + $0x8] sm:$0xf]
  %v29 = vld [vmem:[%s25 + $0xc] sm:$0xf]
  %v30 = vld [vmem:[%s25 + $0x10] sm:$0xf]
  %v31 = vld [vmem:[%s25 + $0x14] sm:$0xf]
  %v32 = vld [vmem:[%s25 + $0x18] sm:$0xf]
  %v33 = vld [vmem:[%s25 + $0x1c] sm:$0xf]
  %v37 = vunpack.c.l.b16 %v14
  %v38 = vunpack.c.l.b16 %v15
  %v39 = vunpack.c.l.b16 %v16
  %v40 = vpack.c.b16 %v38, %v37
  %v41 = vpack.c.b16 %v39, %v39
  %vm42 = vsmask.f32 7424
  %v44 = vshrl.u32 %v40, 16
  %v46 = vshll.u32 %v40, 16
  %v48 = vrot.slane %v46, 1
  %v49 = vor.u32 %v44, %v48
  %v51 = vshll.u32 %v41, 16
  %v53 = vrot.slane %v51, 1
  %v54 = vsel %vm42, %v49, %v53
  %v63 = vunpack.c.l.b16 %v26
  %v64 = vunpack.c.l.b16 %v27
  %v65 = vunpack.c.l.b16 %v28
  %v66 = vunpack.c.l.b16 %v29
  %v67 = vunpack.c.l.b16 %v30
  %v68 = vunpack.c.l.b16 %v31
  %v69 = vunpack.c.l.b16 %v32
  %v70 = vunpack.c.l.b16 %v33
  %v71 = vpack.c.b16 %v64, %v63
  %v72 = vpack.c.b16 %v66, %v65
  %v73 = vpack.c.b16 %v68, %v67
  %v74 = vpack.c.b16 %v70, %v69
  %vm79 = vcmask 523264
  %v81 = vsel %vm79, %v54, 0
  %83 = vmatpush.bf16.msra.mxu0 0
  %84 = vmatpush.bf16.msra.mxu0 0
  %85 = vmatpush.bf16.msra.mxu0 0
  %86 = vmatpush.bf16.msra.mxu0 0
  %87 = vmatpush.bf16.msra.mxu0 %v74
  %88 = vmatpush.bf16.msra.mxu0 %v73
  %89 = vmatpush.bf16.msra.mxu0 %v72
  %90 = vmatpush.bf16.msra.mxu0 %v71
  %91 = vmatmul.bf16.gmra.mxu0 %v81
  %v92 = vpop.f32.mrf.mxu0
  %v93 = vadd.f32 0.0, %v92
  %v94 = vpop.f32.mrf.mxu0
  %v95 = vadd.f32 0.0, %v94
  %96 = vdwg.mxu0
  %v105 = vunpack.c.l.b16 %v17
  %v106 = vunpack.c.l.b16 %v18
  %v107 = vunpack.c.l.b16 %v19
  %v108 = vunpack.c.l.b16 %v20
  %v109 = vunpack.c.l.b16 %v21
  %v110 = vunpack.c.l.b16 %v22
  %v111 = vunpack.c.l.b16 %v23
  %v112 = vunpack.c.l.b16 %v24
  %v113 = vpack.c.b16 %v106, %v105
  %v114 = vpack.c.b16 %v108, %v107
  %v115 = vpack.c.b16 %v110, %v109
  %v116 = vpack.c.b16 %v112, %v111
  %v121 = vsel %vm79, %v40, 0
  %123 = vmatpush.bf16.msra.mxu0 0
  %124 = vmatpush.bf16.msra.mxu0 0
  %125 = vmatpush.bf16.msra.mxu0 0
  %126 = vmatpush.bf16.msra.mxu0 0
  %127 = vmatpush.bf16.msra.mxu0 %v116
  %128 = vmatpush.bf16.msra.mxu0 %v115
  %129 = vmatpush.bf16.msra.mxu0 %v114
  %130 = vmatpush.bf16.msra.mxu0 %v113
  %131 = vmatmul.bf16.gmra.mxu0 %v121
  %v132 = vpop.f32.mrf.mxu0
  %v133 = vadd.f32 %v93, %v132
  %v134 = vpop.f32.mrf.mxu0
  %v135 = vadd.f32 %v95, %v134
  %136 = vdwg.mxu0
  %s137 = scalar_lea.vmem %s1, 64
  %v138 = vld [vmem:[%s137] sm:$0xf]
  %v139 = vld [vmem:[%s137 + $0x4] sm:$0xf]
  %v140 = vld [vmem:[%s137 + $0x8] sm:$0xf]
  %v141 = vld [vmem:[%s137 + $0xc] sm:$0xf]
  %v142 = vld [vmem:[%s137 + $0x10] sm:$0xf]
  %v143 = vld [vmem:[%s137 + $0x14] sm:$0xf]
  %v144 = vld [vmem:[%s137 + $0x18] sm:$0xf]
  %v145 = vld [vmem:[%s137 + $0x1c] sm:$0xf]
  %vm146 = vcmask 1046528
  %v147 = vrot.slane %v40, 1
  %v148 = vrot.slane %v41, 1
  %v149 = vsel %vm146, %v147, %v148
  %v158 = vunpack.c.l.b16 %v138
  %v159 = vunpack.c.l.b16 %v139
  %v160 = vunpack.c.l.b16 %v140
  %v161 = vunpack.c.l.b16 %v141
  %v162 = vunpack.c.l.b16 %v142
  %v163 = vunpack.c.l.b16 %v143
  %v164 = vunpack.c.l.b16 %v144
  %v165 = vunpack.c.l.b16 %v145
  %v166 = vpack.c.b16 %v159, %v158
  %v167 = vpack.c.b16 %v161, %v160
  %v168 = vpack.c.b16 %v163, %v162
  %v169 = vpack.c.b16 %v165, %v164
  %v175 = vsel %vm79, %v149, 0
  %177 = vmatpush.bf16.msra.mxu0 0
  %178 = vmatpush.bf16.msra.mxu0 0
  %179 = vmatpush.bf16.msra.mxu0 0
  %180 = vmatpush.bf16.msra.mxu0 0
  %181 = vmatpush.bf16.msra.mxu0 %v169
  %182 = vmatpush.bf16.msra.mxu0 %v168
  %183 = vmatpush.bf16.msra.mxu0 %v167
  %184 = vmatpush.bf16.msra.mxu0 %v166
  %185 = vmatmul.bf16.gmra.mxu0 %v175
  %v186 = vpop.f32.mrf.mxu0
  %v187 = vadd.f32 0.0, %v186
  %v188 = vpop.f32.mrf.mxu0
  %v189 = vadd.f32 0.0, %v188
  %190 = vdwg.mxu0
  %v191 = vadd.f32 %v133, %v187
  %v192 = vadd.f32 %v135, %v189
  %v193 = vadd.f32 %v191, %v192
  %v194 = vrot.slane %v193, 4
  %v195 = vadd.f32 %v193, %v194
  %v196 = vrot.slane %v195, 2
  %v197 = vadd.f32 %v195, %v196
  %v198 = vrot.slane %v197, 1
  %v199 = vadd.f32 %v197, %v198
  %v200 = vmul.f32 %v191, %v191
  %v201 = vmul.f32 %v192, %v192
  %v202 = vadd.f32 %v200, %v201
  %v203 = vrot.slane %v202, 4
  %v204 = vadd.f32 %v202, %v203
  %v205 = vrot.slane %v204, 2
  %v206 = vadd.f32 %v204, %v205
  %v207 = vrot.slane %v206, 1
  %v208 = vadd.f32 %v206, %v207
  %vm209 = vcmask 1040384
  %v210 = vsel %vm209, %v199, %v208
  %211 = vst [vmem:[%s2] sm:$0xff] %v191
  %212 = vst [vmem:[%s2 + $0x8] sm:$0xff] %v192
  %213 = vst [vmem:[%s3] sm:$0x3] %v210
  %s214 = scalar_lea.vmem %s0, 12
  %v215 = vld [vmem:[%s214] sm:$0xf]
  %v216 = vld [vmem:[%s214 + $0x4] sm:$0xf]
  %v217 = vld [vmem:[%s214 + $0x8] sm:$0x1]
  %v218 = vld [vmem:[%s1] sm:$0xf]
  %v219 = vld [vmem:[%s1 + $0x4] sm:$0xf]
  %v220 = vld [vmem:[%s1 + $0x8] sm:$0xf]
  %v221 = vld [vmem:[%s1 + $0xc] sm:$0xf]
  %v222 = vld [vmem:[%s1 + $0x10] sm:$0xf]
  %v223 = vld [vmem:[%s1 + $0x14] sm:$0xf]
  %v224 = vld [vmem:[%s1 + $0x18] sm:$0xf]
  %v225 = vld [vmem:[%s1 + $0x1c] sm:$0xf]
  %v226 = vld [vmem:[%s25] sm:$0xf]
  %v227 = vld [vmem:[%s25 + $0x4] sm:$0xf]
  %v228 = vld [vmem:[%s25 + $0x8] sm:$0xf]
  %v229 = vld [vmem:[%s25 + $0xc] sm:$0xf]
  %v230 = vld [vmem:[%s25 + $0x10] sm:$0xf]
  %v231 = vld [vmem:[%s25 + $0x14] sm:$0xf]
  %v232 = vld [vmem:[%s25 + $0x18] sm:$0xf]
  %v233 = vld [vmem:[%s25 + $0x1c] sm:$0xf]
  %v237 = vunpack.c.l.b16 %v215
  %v238 = vunpack.c.l.b16 %v216
  %v239 = vunpack.c.l.b16 %v217
  %v240 = vpack.c.b16 %v238, %v237
  %v241 = vpack.c.b16 %v239, %v239
  %v243 = vshrl.u32 %v240, 16
  %v245 = vshll.u32 %v240, 16
  %v247 = vrot.slane %v245, 1
  %v248 = vor.u32 %v243, %v247
  %v250 = vshll.u32 %v241, 16
  %v252 = vrot.slane %v250, 1
  %v253 = vsel %vm42, %v248, %v252
  %v262 = vunpack.c.l.b16 %v226
  %v263 = vunpack.c.l.b16 %v227
  %v264 = vunpack.c.l.b16 %v228
  %v265 = vunpack.c.l.b16 %v229
  %v266 = vunpack.c.l.b16 %v230
  %v267 = vunpack.c.l.b16 %v231
  %v268 = vunpack.c.l.b16 %v232
  %v269 = vunpack.c.l.b16 %v233
  %v270 = vpack.c.b16 %v263, %v262
  %v271 = vpack.c.b16 %v265, %v264
  %v272 = vpack.c.b16 %v267, %v266
  %v273 = vpack.c.b16 %v269, %v268
  %v279 = vsel %vm79, %v253, 0
  %281 = vmatpush.bf16.msra.mxu0 0
  %282 = vmatpush.bf16.msra.mxu0 0
  %283 = vmatpush.bf16.msra.mxu0 0
  %284 = vmatpush.bf16.msra.mxu0 0
  %285 = vmatpush.bf16.msra.mxu0 %v273
  %286 = vmatpush.bf16.msra.mxu0 %v272
  %287 = vmatpush.bf16.msra.mxu0 %v271
  %288 = vmatpush.bf16.msra.mxu0 %v270
  %289 = vmatmul.bf16.gmra.mxu0 %v279
  %v290 = vpop.f32.mrf.mxu0
  %v291 = vadd.f32 0.0, %v290
  %v292 = vpop.f32.mrf.mxu0
  %v293 = vadd.f32 0.0, %v292
  %294 = vdwg.mxu0
  %v303 = vunpack.c.l.b16 %v218
  %v304 = vunpack.c.l.b16 %v219
  %v305 = vunpack.c.l.b16 %v220
  %v306 = vunpack.c.l.b16 %v221
  %v307 = vunpack.c.l.b16 %v222
  %v308 = vunpack.c.l.b16 %v223
  %v309 = vunpack.c.l.b16 %v224
  %v310 = vunpack.c.l.b16 %v225
  %v311 = vpack.c.b16 %v304, %v303
  %v312 = vpack.c.b16 %v306, %v305
  %v313 = vpack.c.b16 %v308, %v307
  %v314 = vpack.c.b16 %v310, %v309
  %v319 = vsel %vm79, %v240, 0
  %321 = vmatpush.bf16.msra.mxu0 0
  %322 = vmatpush.bf16.msra.mxu0 0
  %323 = vmatpush.bf16.msra.mxu0 0
  %324 = vmatpush.bf16.msra.mxu0 0
  %325 = vmatpush.bf16.msra.mxu0 %v314
  %326 = vmatpush.bf16.msra.mxu0 %v313
  %327 = vmatpush.bf16.msra.mxu0 %v312
  %328 = vmatpush.bf16.msra.mxu0 %v311
  %329 = vmatmul.bf16.gmra.mxu0 %v319
  %v330 = vpop.f32.mrf.mxu0
  %v331 = vadd.f32 %v291, %v330
  %v332 = vpop.f32.mrf.mxu0
  %v333 = vadd.f32 %v293, %v332
  %334 = vdwg.mxu0
  %v335 = vld [vmem:[%s137] sm:$0xf]
  %v336 = vld [vmem:[%s137 + $0x4] sm:$0xf]
  %v337 = vld [vmem:[%s137 + $0x8] sm:$0xf]
  %v338 = vld [vmem:[%s137 + $0xc] sm:$0xf]
  %v339 = vld [vmem:[%s137 + $0x10] sm:$0xf]
  %v340 = vld [vmem:[%s137 + $0x14] sm:$0xf]
  %v341 = vld [vmem:[%s137 + $0x18] sm:$0xf]
  %v342 = vld [vmem:[%s137 + $0x1c] sm:$0xf]
  %v343 = vrot.slane %v240, 1
  %v344 = vrot.slane %v241, 1
  %v345 = vsel %vm146, %v343, %v344
  %v354 = vunpack.c.l.b16 %v335
  %v355 = vunpack.c.l.b16 %v336
  %v356 = vunpack.c.l.b16 %v337
  %v357 = vunpack.c.l.b16 %v338
  %v358 = vunpack.c.l.b16 %v339
  %v359 = vunpack.c.l.b16 %v340
  %v360 = vunpack.c.l.b16 %v341
  %v361 = vunpack.c.l.b16 %v342
  %v362 = vpack.c.b16 %v355, %v354
  %v363 = vpack.c.b16 %v357, %v356
  %v364 = vpack.c.b16 %v359, %v358
  %v365 = vpack.c.b16 %v361, %v360
  %v371 = vsel %vm79, %v345, 0
  %373 = vmatpush.bf16.msra.mxu0 0
  %374 = vmatpush.bf16.msra.mxu0 0
  %375 = vmatpush.bf16.msra.mxu0 0
  %376 = vmatpush.bf16.msra.mxu0 0
  %377 = vmatpush.bf16.msra.mxu0 %v365
  %378 = vmatpush.bf16.msra.mxu0 %v364
  %379 = vmatpush.bf16.msra.mxu0 %v363
  %380 = vmatpush.bf16.msra.mxu0 %v362
  %381 = vmatmul.bf16.gmra.mxu0 %v371
  %v382 = vpop.f32.mrf.mxu0
  %v383 = vadd.f32 0.0, %v382
  %v384 = vpop.f32.mrf.mxu0
  %v385 = vadd.f32 0.0, %v384
  %386 = vdwg.mxu0
  %v387 = vadd.f32 %v331, %v383
  %v388 = vadd.f32 %v333, %v385
  %v389 = vadd.f32 %v387, %v388
  %v390 = vrot.slane %v389, 4
  %v391 = vadd.f32 %v389, %v390
  %v392 = vrot.slane %v391, 2
  %v393 = vadd.f32 %v391, %v392
  %v394 = vrot.slane %v393, 1
  %v395 = vadd.f32 %v393, %v394
  %v396 = vmul.f32 %v387, %v387
  %v397 = vmul.f32 %v388, %v388
  %v398 = vadd.f32 %v396, %v397
  %v399 = vrot.slane %v398, 4
  %v400 = vadd.f32 %v398, %v399
  %v401 = vrot.slane %v400, 2
  %v402 = vadd.f32 %v400, %v401
  %v403 = vrot.slane %v402, 1
  %v404 = vadd.f32 %v402, %v403
  %v405 = vsel %vm209, %v395, %v404
  %s406 = scalar_lea.vmem %s2, 16
  %407 = vst [vmem:[%s406] sm:$0xff] %v387
  %408 = vst [vmem:[%s406 + $0x8] sm:$0xff] %v388
  %s409 = scalar_lea.vmem %s3, 2
  %410 = vst [vmem:[%s409] sm:$0x3] %v405
  // Predicated region
  $region10: #{_forward.2} parent=0 // pred_check
    _
  $region11: #{_forward.2} parent=0 // pred_check_branch
    %412 = sbr.rel (0) target = $region13
  $region12: #{_forward.2} parent=0 // pred_region
    _
  $region13: #{_forward.2} parent=0 // pred_fallthru
    _
  // Predicated region
  $region14: #{_forward.2} parent=0 // pred_check
    _
  $region15: #{_forward.2} parent=0 // pred_check_branch
    %414 = sbr.rel (0) target = $region17
  $region16: #{_forward.2} parent=0 // pred_region
    _
  $region17: #{_forward.2} parent=0 // pred_fallthru
    _
  // Predicated region
  $region18: #{_forward.2} parent=0 // pred_check
    _
  $region19: #{_forward.2} parent=0 // pred_check_branch
    %416 = sbr.rel (0) target = $region21
  $region20: #{_forward.2} parent=0 // pred_region
    _
  $region21: #{_forward.2} parent=0 // pred_fallthru
    _
  // Predicated region
  $region22: #{_forward.2} parent=0 // pred_check
    _
  $region23: #{_forward.2} parent=0 // pred_check_branch
    %418 = sbr.rel (0) target = $region25
  $region24: #{_forward.2} parent=0 // pred_region
    _
  $region25: #{_forward.2} parent=0 // pred_fallthru
    _

// kernel: _forward.3
$region0: #{_forward.3}
  #allocation0 [shape = 'u32[]', space=smem, size = 0x4, offset = 0x4, fixed_abs, tag = 'smem constant byte address 0x4 - core index']
  #allocation1 [shape = 'u32[72,128]{1,0:T(1,128)}', space=vmem, size = 0x9000, scoped, tag = 'internal scratch']
  #allocation2 [shape = 'f32[18,128]{1,0:T(8,128)}', space=vmem, size = 0x3000, scoped, tag = 'scratch operand']
  %s0 = inlined_call_operand.vmem [shape: f32[2,16,128], index: 0, kind: input, shape index: {}]
  %s1 = inlined_call_operand.vmem [shape: f32[2,1,128], index: 1, kind: input, shape index: {}]
  %s2 = inlined_call_operand.vmem [shape: f32[2,1,128], index: 2, kind: input, shape index: {}]
  %s3 = inlined_call_operand.vmem [shape: bf16[3,128,128], index: 3, kind: input, shape index: {}]
  %s4 = inlined_call_operand.vmem [shape: f32[2,16,128], index: 4, kind: output, shape index: {0}]
  %s5 = inlined_call_operand.vmem [shape: f32[2,2,128], index: 5, kind: output, shape index: {1}]
  %6 = xla_tuple %s4, %s5
  %s7 = sld [smem:[#allocation0]]
  $region34: #{_forward.3} parent=0
    _
  %s9 = ssub.s32 1, %s7
  %s10 = scalar_select 0, %s9, %s7
  // Predicated region
  $region2: #{_forward.3} parent=0 // pred_check
    _
  $region3: #{_forward.3} parent=0 // pred_check_branch
    %12 = sbr.rel (0) target = $region5
  $region4: #{_forward.3} parent=0 // pred_region
    _
  $region5: #{_forward.3} parent=0 // pred_fallthru
    _
  // Predicated region
  $region6: #{_forward.3} parent=0 // pred_check
    _
  $region7: #{_forward.3} parent=0 // pred_check_branch
    %14 = sbr.rel (0) target = $region9
  $region8: #{_forward.3} parent=0 // pred_region
    _
  $region9: #{_forward.3} parent=0 // pred_fallthru
    _
  // Predicated region
  $region10: #{_forward.3} parent=0 // pred_check
    _
  $region11: #{_forward.3} parent=0 // pred_check_branch
    %16 = sbr.rel (0) target = $region13
  $region12: #{_forward.3} parent=0 // pred_region
    _
  $region13: #{_forward.3} parent=0 // pred_fallthru
    _
  // Predicated region
  $region14: #{_forward.3} parent=0 // pred_check
    _
  $region15: #{_forward.3} parent=0 // pred_check_branch
    %18 = sbr.rel (0) target = $region17
  $region16: #{_forward.3} parent=0 // pred_region
    _
  $region17: #{_forward.3} parent=0 // pred_fallthru
    _
  %19 = vst [vmem:[#allocation2] sm:$0x1] 0.0
  %20 = vst [vmem:[#allocation2 + $0x11] sm:$0x1] 0.0
  %v21 = vld [vmem:[%s0] sm:$0xff]
  %v22 = vld [vmem:[%s0 + $0x8] sm:$0xff]
  %v23 = vld [vmem:[%s1] sm:$0x1]
  %v25 = vperm.slane %v23, 0
  %v27 = vmul.f32 %v21, %v25
  %v28 = vmul.f32 %v22, %v25
  %v29 = vld [vmem:[%s2] sm:$0x1]
  %v31 = vperm.slane %v29, 0
  %v33 = vadd.f32 %v27, %v31
  %v34 = vadd.f32 %v28, %v31
  %v35 = vmax.f32 %v33, 0.0
  %v36 = vmax.f32 %v34, 0.0
  %37 = vst [vmem:[#allocation2 + $0x1] sm:$0xff] %v35
  %38 = vst [vmem:[#allocation2 + $0x9] sm:$0xff] %v36
  %v39 = vld [vmem:[#allocation2] sm:$0xff]
  %v40 = vld [vmem:[#allocation2 + $0x8] sm:$0xff]
  %v41 = vld [vmem:[#allocation2 + $0x10] sm:$0x3]
  %v42 = vpack.c.bf16 %v39, %v39
  %v43 = vpack.c.bf16 %v40, %v40
  %v44 = vpack.c.bf16 %v41, %v41
  %v45 = vld [vmem:[%s3] sm:$0xf]
  %v46 = vld [vmem:[%s3 + $0x4] sm:$0xf]
  %v47 = vld [vmem:[%s3 + $0x8] sm:$0xf]
  %v48 = vld [vmem:[%s3 + $0xc] sm:$0xf]
  %v49 = vld [vmem:[%s3 + $0x10] sm:$0xf]
  %v50 = vld [vmem:[%s3 + $0x14] sm:$0xf]
  %v51 = vld [vmem:[%s3 + $0x18] sm:$0xf]
  %v52 = vld [vmem:[%s3 + $0x1c] sm:$0xf]
  %v53 = vld [vmem:[%s3 + $0x20] sm:$0xf]
  %v54 = vld [vmem:[%s3 + $0x24] sm:$0xf]
  %v55 = vld [vmem:[%s3 + $0x28] sm:$0xf]
  %v56 = vld [vmem:[%s3 + $0x2c] sm:$0xf]
  %v57 = vld [vmem:[%s3 + $0x30] sm:$0xf]
  %v58 = vld [vmem:[%s3 + $0x34] sm:$0xf]
  %v59 = vld [vmem:[%s3 + $0x38] sm:$0xf]
  %v60 = vld [vmem:[%s3 + $0x3c] sm:$0xf]
  %s61 = scalar_lea.vmem %s3, 64
  %v62 = vld [vmem:[%s61] sm:$0xf]
  %v63 = vld [vmem:[%s61 + $0x4] sm:$0xf]
  %v64 = vld [vmem:[%s61 + $0x8] sm:$0xf]
  %v65 = vld [vmem:[%s61 + $0xc] sm:$0xf]
  %v66 = vld [vmem:[%s61 + $0x10] sm:$0xf]
  %v67 = vld [vmem:[%s61 + $0x14] sm:$0xf]
  %v68 = vld [vmem:[%s61 + $0x18] sm:$0xf]
  %v69 = vld [vmem:[%s61 + $0x1c] sm:$0xf]
  %v70 = vld [vmem:[%s61 + $0x20] sm:$0xf]
  %v71 = vld [vmem:[%s61 + $0x24] sm:$0xf]
  %v72 = vld [vmem:[%s61 + $0x28] sm:$0xf]
  %v73 = vld [vmem:[%s61 + $0x2c] sm:$0xf]
  %v74 = vld [vmem:[%s61 + $0x30] sm:$0xf]
  %v75 = vld [vmem:[%s61 + $0x34] sm:$0xf]
  %v76 = vld [vmem:[%s61 + $0x38] sm:$0xf]
  %v77 = vld [vmem:[%s61 + $0x3c] sm:$0xf]
  %v81 = vunpack.c.l.b16 %v42
  %v82 = vunpack.c.l.b16 %v43
  %v83 = vunpack.c.l.b16 %v44
  %v84 = vpack.c.b16 %v82, %v81
  %v85 = vpack.c.b16 %v83, %v83
  %vm86 = vsmask.f32 7424
  %v88 = vshrl.u32 %v84, 16
  %v90 = vshll.u32 %v84, 16
  %v92 = vrot.slane %v90, 1
  %v93 = vor.u32 %v88, %v92
  %v95 = vshll.u32 %v85, 16
  %v97 = vrot.slane %v95, 1
  %v98 = vsel %vm86, %v93, %v97
  %v116 = vunpack.c.l.b16 %v62
  %v117 = vunpack.c.l.b16 %v63
  %v118 = vunpack.c.l.b16 %v64
  %v119 = vunpack.c.l.b16 %v65
  %v120 = vunpack.c.l.b16 %v66
  %v121 = vunpack.c.l.b16 %v67
  %v122 = vunpack.c.l.b16 %v68
  %v123 = vunpack.c.l.b16 %v69
  %v124 = vunpack.c.l.b16 %v70
  %v125 = vunpack.c.l.b16 %v71
  %v126 = vunpack.c.l.b16 %v72
  %v127 = vunpack.c.l.b16 %v73
  %v128 = vunpack.c.l.b16 %v74
  %v129 = vunpack.c.l.b16 %v75
  %v130 = vunpack.c.l.b16 %v76
  %v131 = vunpack.c.l.b16 %v77
  %v132 = vpack.c.b16 %v117, %v116
  %v133 = vpack.c.b16 %v119, %v118
  %v134 = vpack.c.b16 %v121, %v120
  %v135 = vpack.c.b16 %v123, %v122
  %v136 = vpack.c.b16 %v125, %v124
  %v137 = vpack.c.b16 %v127, %v126
  %v138 = vpack.c.b16 %v129, %v128
  %v139 = vpack.c.b16 %v131, %v130
  %148 = vmatpush.bf16.msra.mxu0 %v139
  %149 = vmatpush.bf16.msra.mxu0 %v138
  %150 = vmatpush.bf16.msra.mxu0 %v137
  %151 = vmatpush.bf16.msra.mxu0 %v136
  %152 = vmatpush.bf16.msra.mxu0 %v135
  %153 = vmatpush.bf16.msra.mxu0 %v134
  %154 = vmatpush.bf16.msra.mxu0 %v133
  %155 = vmatpush.bf16.msra.mxu0 %v132
  %156 = vmatmul.bf16.gmra.mxu0 %v98
  %v157 = vpop.f32.mrf.mxu0
  %v158 = vadd.f32 0.0, %v157
  %v159 = vpop.f32.mrf.mxu0
  %v160 = vadd.f32 0.0, %v159
  %161 = vdwg.mxu0
  %v179 = vunpack.c.l.b16 %v45
  %v180 = vunpack.c.l.b16 %v46
  %v181 = vunpack.c.l.b16 %v47
  %v182 = vunpack.c.l.b16 %v48
  %v183 = vunpack.c.l.b16 %v49
  %v184 = vunpack.c.l.b16 %v50
  %v185 = vunpack.c.l.b16 %v51
  %v186 = vunpack.c.l.b16 %v52
  %v187 = vunpack.c.l.b16 %v53
  %v188 = vunpack.c.l.b16 %v54
  %v189 = vunpack.c.l.b16 %v55
  %v190 = vunpack.c.l.b16 %v56
  %v191 = vunpack.c.l.b16 %v57
  %v192 = vunpack.c.l.b16 %v58
  %v193 = vunpack.c.l.b16 %v59
  %v194 = vunpack.c.l.b16 %v60
  %v195 = vpack.c.b16 %v180, %v179
  %v196 = vpack.c.b16 %v182, %v181
  %v197 = vpack.c.b16 %v184, %v183
  %v198 = vpack.c.b16 %v186, %v185
  %v199 = vpack.c.b16 %v188, %v187
  %v200 = vpack.c.b16 %v190, %v189
  %v201 = vpack.c.b16 %v192, %v191
  %v202 = vpack.c.b16 %v194, %v193
  %211 = vmatpush.bf16.msra.mxu0 %v202
  %212 = vmatpush.bf16.msra.mxu0 %v201
  %213 = vmatpush.bf16.msra.mxu0 %v200
  %214 = vmatpush.bf16.msra.mxu0 %v199
  %215 = vmatpush.bf16.msra.mxu0 %v198
  %216 = vmatpush.bf16.msra.mxu0 %v197
  %217 = vmatpush.bf16.msra.mxu0 %v196
  %218 = vmatpush.bf16.msra.mxu0 %v195
  %219 = vmatmul.bf16.gmra.mxu0 %v84
  %v220 = vpop.f32.mrf.mxu0
  %v221 = vadd.f32 %v158, %v220
  %v222 = vpop.f32.mrf.mxu0
  %v223 = vadd.f32 %v160, %v222
  %224 = vdwg.mxu0
  %s225 = scalar_lea.vmem %s3, 128
  %v226 = vld [vmem:[%s225] sm:$0xf]
  %v227 = vld [vmem:[%s225 + $0x4] sm:$0xf]
  %v228 = vld [vmem:[%s225 + $0x8] sm:$0xf]
  %v229 = vld [vmem:[%s225 + $0xc] sm:$0xf]
  %v230 = vld [vmem:[%s225 + $0x10] sm:$0xf]
  %v231 = vld [vmem:[%s225 + $0x14] sm:$0xf]
  %v232 = vld [vmem:[%s225 + $0x18] sm:$0xf]
  %v233 = vld [vmem:[%s225 + $0x1c] sm:$0xf]
  %v234 = vld [vmem:[%s225 + $0x20] sm:$0xf]
  %v235 = vld [vmem:[%s225 + $0x24] sm:$0xf]
  %v236 = vld [vmem:[%s225 + $0x28] sm:$0xf]
  %v237 = vld [vmem:[%s225 + $0x2c] sm:$0xf]
  %v238 = vld [vmem:[%s225 + $0x30] sm:$0xf]
  %v239 = vld [vmem:[%s225 + $0x34] sm:$0xf]
  %v240 = vld [vmem:[%s225 + $0x38] sm:$0xf]
  %v241 = vld [vmem:[%s225 + $0x3c] sm:$0xf]
  %vm242 = vcmask 1046528
  %v243 = vrot.slane %v84, 1
  %v244 = vrot.slane %v85, 1
  %v245 = vsel %vm242, %v243, %v244
  %v263 = vunpack.c.l.b16 %v226
  %v264 = vunpack.c.l.b16 %v227
  %v265 = vunpack.c.l.b16 %v228
  %v266 = vunpack.c.l.b16 %v229
  %v267 = vunpack.c.l.b16 %v230
  %v268 = vunpack.c.l.b16 %v231
  %v269 = vunpack.c.l.b16 %v232
  %v270 = vunpack.c.l.b16 %v233
  %v271 = vunpack.c.l.b16 %v234
  %v272 = vunpack.c.l.b16 %v235
  %v273 = vunpack.c.l.b16 %v236
  %v274 = vunpack.c.l.b16 %v237
  %v275 = vunpack.c.l.b16 %v238
  %v276 = vunpack.c.l.b16 %v239
  %v277 = vunpack.c.l.b16 %v240
  %v278 = vunpack.c.l.b16 %v241
  %v279 = vpack.c.b16 %v264, %v263
  %v280 = vpack.c.b16 %v266, %v265
  %v281 = vpack.c.b16 %v268, %v267
  %v282 = vpack.c.b16 %v270, %v269
  %v283 = vpack.c.b16 %v272, %v271
  %v284 = vpack.c.b16 %v274, %v273
  %v285 = vpack.c.b16 %v276, %v275
  %v286 = vpack.c.b16 %v278, %v277
  %295 = vmatpush.bf16.msra.mxu0 %v286
  %296 = vmatpush.bf16.msra.mxu0 %v285
  %297 = vmatpush.bf16.msra.mxu0 %v284
  %298 = vmatpush.bf16.msra.mxu0 %v283
  %299 = vmatpush.bf16.msra.mxu0 %v282
  %300 = vmatpush.bf16.msra.mxu0 %v281
  %301 = vmatpush.bf16.msra.mxu0 %v280
  %302 = vmatpush.bf16.msra.mxu0 %v279
  %303 = vmatmul.bf16.gmra.mxu0 %v245
  %v304 = vpop.f32.mrf.mxu0
  %v305 = vadd.f32 0.0, %v304
  %v306 = vpop.f32.mrf.mxu0
  %v307 = vadd.f32 0.0, %v306
  %308 = vdwg.mxu0
  %v309 = vadd.f32 %v221, %v305
  %v310 = vadd.f32 %v223, %v307
  %v311 = vadd.f32 %v309, %v310
  %v312 = vrot.slane %v311, 4
  %v313 = vadd.f32 %v311, %v312
  %v314 = vrot.slane %v313, 2
  %v315 = vadd.f32 %v313, %v314
  %v316 = vrot.slane %v315, 1
  %v317 = vadd.f32 %v315, %v316
  %v318 = vmul.f32 %v309, %v309
  %v319 = vmul.f32 %v310, %v310
  %v320 = vadd.f32 %v318, %v319
  %v321 = vrot.slane %v320, 4
  %v322 = vadd.f32 %v320, %v321
  %v323 = vrot.slane %v322, 2
  %v324 = vadd.f32 %v322, %v323
  %v325 = vrot.slane %v324, 1
  %v326 = vadd.f32 %v324, %v325
  %vm327 = vcmask 1040384
  %v328 = vsel %vm327, %v317, %v326
  %329 = vst [vmem:[%s4] sm:$0xff] %v309
  %330 = vst [vmem:[%s4 + $0x8] sm:$0xff] %v310
  %331 = vst [vmem:[%s5] sm:$0x3] %v328
  %s332 = scalar_lea.vmem %s0, 16
  %v333 = vld [vmem:[%s332] sm:$0xff]
  %v334 = vld [vmem:[%s332 + $0x8] sm:$0xff]
  %s335 = scalar_lea.vmem %s1, 1
  %v336 = vld [vmem:[%s335] sm:$0x1]
  %v338 = vperm.slane %v336, 0
  %v340 = vmul.f32 %v333, %v338
  %v341 = vmul.f32 %v334, %v338
  %s342 = scalar_lea.vmem %s2, 1
  %v343 = vld [vmem:[%s342] sm:$0x1]
  %v345 = vperm.slane %v343, 0
  %v347 = vadd.f32 %v340, %v345
  %v348 = vadd.f32 %v341, %v345
  %v349 = vmax.f32 %v347, 0.0
  %v350 = vmax.f32 %v348, 0.0
  %351 = vst [vmem:[#allocation2 + $0x1] sm:$0xff] %v349
  %352 = vst [vmem:[#allocation2 + $0x9] sm:$0xff] %v350
  %v353 = vld [vmem:[#allocation2] sm:$0xff]
  %v354 = vld [vmem:[#allocation2 + $0x8] sm:$0xff]
  %v355 = vld [vmem:[#allocation2 + $0x10] sm:$0x3]
  %v356 = vpack.c.bf16 %v353, %v353
  %v357 = vpack.c.bf16 %v354, %v354
  %v358 = vpack.c.bf16 %v355, %v355
  %v359 = vld [vmem:[%s3] sm:$0xf]
  %v360 = vld [vmem:[%s3 + $0x4] sm:$0xf]
  %v361 = vld [vmem:[%s3 + $0x8] sm:$0xf]
  %v362 = vld [vmem:[%s3 + $0xc] sm:$0xf]
  %v363 = vld [vmem:[%s3 + $0x10] sm:$0xf]
  %v364 = vld [vmem:[%s3 + $0x14] sm:$0xf]
  %v365 = vld [vmem:[%s3 + $0x18] sm:$0xf]
  %v366 = vld [vmem:[%s3 + $0x1c] sm:$0xf]
  %v367 = vld [vmem:[%s3 + $0x20] sm:$0xf]
  %v368 = vld [vmem:[%s3 + $0x24] sm:$0xf]
  %v369 = vld [vmem:[%s3 + $0x28] sm:$0xf]
  %v370 = vld [vmem:[%s3 + $0x2c] sm:$0xf]
  %v371 = vld [vmem:[%s3 + $0x30] sm:$0xf]
  %v372 = vld [vmem:[%s3 + $0x34] sm:$0xf]
  %v373 = vld [vmem:[%s3 + $0x38] sm:$0xf]
  %v374 = vld [vmem:[%s3 + $0x3c] sm:$0xf]
  %v375 = vld [vmem:[%s61] sm:$0xf]
  %v376 = vld [vmem:[%s61 + $0x4] sm:$0xf]
  %v377 = vld [vmem:[%s61 + $0x8] sm:$0xf]
  %v378 = vld [vmem:[%s61 + $0xc] sm:$0xf]
  %v379 = vld [vmem:[%s61 + $0x10] sm:$0xf]
  %v380 = vld [vmem:[%s61 + $0x14] sm:$0xf]
  %v381 = vld [vmem:[%s61 + $0x18] sm:$0xf]
  %v382 = vld [vmem:[%s61 + $0x1c] sm:$0xf]
  %v383 = vld [vmem:[%s61 + $0x20] sm:$0xf]
  %v384 = vld [vmem:[%s61 + $0x24] sm:$0xf]
  %v385 = vld [vmem:[%s61 + $0x28] sm:$0xf]
  %v386 = vld [vmem:[%s61 + $0x2c] sm:$0xf]
  %v387 = vld [vmem:[%s61 + $0x30] sm:$0xf]
  %v388 = vld [vmem:[%s61 + $0x34] sm:$0xf]
  %v389 = vld [vmem:[%s61 + $0x38] sm:$0xf]
  %v390 = vld [vmem:[%s61 + $0x3c] sm:$0xf]
  %v394 = vunpack.c.l.b16 %v356
  %v395 = vunpack.c.l.b16 %v357
  %v396 = vunpack.c.l.b16 %v358
  %v397 = vpack.c.b16 %v395, %v394
  %v398 = vpack.c.b16 %v396, %v396
  %v400 = vshrl.u32 %v397, 16
  %v402 = vshll.u32 %v397, 16
  %v404 = vrot.slane %v402, 1
  %v405 = vor.u32 %v400, %v404
  %v407 = vshll.u32 %v398, 16
  %v409 = vrot.slane %v407, 1
  %v410 = vsel %vm86, %v405, %v409
  %v428 = vunpack.c.l.b16 %v375
  %v429 = vunpack.c.l.b16 %v376
  %v430 = vunpack.c.l.b16 %v377
  %v431 = vunpack.c.l.b16 %v378
  %v432 = vunpack.c.l.b16 %v379
  %v433 = vunpack.c.l.b16 %v380
  %v434 = vunpack.c.l.b16 %v381
  %v435 = vunpack.c.l.b16 %v382
  %v436 = vunpack.c.l.b16 %v383
  %v437 = vunpack.c.l.b16 %v384
  %v438 = vunpack.c.l.b16 %v385
  %v439 = vunpack.c.l.b16 %v386
  %v440 = vunpack.c.l.b16 %v387
  %v441 = vunpack.c.l.b16 %v388
  %v442 = vunpack.c.l.b16 %v389
  %v443 = vunpack.c.l.b16 %v390
  %v444 = vpack.c.b16 %v429, %v428
  %v445 = vpack.c.b16 %v431, %v430
  %v446 = vpack.c.b16 %v433, %v432
  %v447 = vpack.c.b16 %v435, %v434
  %v448 = vpack.c.b16 %v437, %v436
  %v449 = vpack.c.b16 %v439, %v438
  %v450 = vpack.c.b16 %v441, %v440
  %v451 = vpack.c.b16 %v443, %v442
  %460 = vmatpush.bf16.msra.mxu0 %v451
  %461 = vmatpush.bf16.msra.mxu0 %v450
  %462 = vmatpush.bf16.msra.mxu0 %v449
  %463 = vmatpush.bf16.msra.mxu0 %v448
  %464 = vmatpush.bf16.msra.mxu0 %v447
  %465 = vmatpush.bf16.msra.mxu0 %v446
  %466 = vmatpush.bf16.msra.mxu0 %v445
  %467 = vmatpush.bf16.msra.mxu0 %v444
  %468 = vmatmul.bf16.gmra.mxu0 %v410
  %v469 = vpop.f32.mrf.mxu0
  %v470 = vadd.f32 0.0, %v469
  %v471 = vpop.f32.mrf.mxu0
  %v472 = vadd.f32 0.0, %v471
  %473 = vdwg.mxu0
  %v491 = vunpack.c.l.b16 %v359
  %v492 = vunpack.c.l.b16 %v360
  %v493 = vunpack.c.l.b16 %v361
  %v494 = vunpack.c.l.b16 %v362
  %v495 = vunpack.c.l.b16 %v363
  %v496 = vunpack.c.l.b16 %v364
  %v497 = vunpack.c.l.b16 %v365
  %v498 = vunpack.c.l.b16 %v366
  %v499 = vunpack.c.l.b16 %v367
  %v500 = vunpack.c.l.b16 %v368
  %v501 = vunpack.c.l.b16 %v369
  %v502 = vunpack.c.l.b16 %v370
  %v503 = vunpack.c.l.b16 %v371
  %v504 = vunpack.c.l.b16 %v372
  %v505 = vunpack.c.l.b16 %v373
  %v506 = vunpack.c.l.b16 %v374
  %v507 = vpack.c.b16 %v492, %v491
  %v508 = vpack.c.b16 %v494, %v493
  %v509 = vpack.c.b16 %v496, %v495
  %v510 = vpack.c.b16 %v498, %v497
  %v511 = vpack.c.b16 %v500, %v499
  %v512 = vpack.c.b16 %v502, %v501
  %v513 = vpack.c.b16 %v504, %v503
  %v514 = vpack.c.b16 %v506, %v505
  %523 = vmatpush.bf16.msra.mxu0 %v514
  %524 = vmatpush.bf16.msra.mxu0 %v513
  %525 = vmatpush.bf16.msra.mxu0 %v512
  %526 = vmatpush.bf16.msra.mxu0 %v511
  %527 = vmatpush.bf16.msra.mxu0 %v510
  %528 = vmatpush.bf16.msra.mxu0 %v509
  %529 = vmatpush.bf16.msra.mxu0 %v508
  %530 = vmatpush.bf16.msra.mxu0 %v507
  %531 = vmatmul.bf16.gmra.mxu0 %v397
  %v532 = vpop.f32.mrf.mxu0
  %v533 = vadd.f32 %v470, %v532
  %v534 = vpop.f32.mrf.mxu0
  %v535 = vadd.f32 %v472, %v534
  %536 = vdwg.mxu0
  %v537 = vld [vmem:[%s225] sm:$0xf]
  %v538 = vld [vmem:[%s225 + $0x4] sm:$0xf]
  %v539 = vld [vmem:[%s225 + $0x8] sm:$0xf]
  %v540 = vld [vmem:[%s225 + $0xc] sm:$0xf]
  %v541 = vld [vmem:[%s225 + $0x10] sm:$0xf]
  %v542 = vld [vmem:[%s225 + $0x14] sm:$0xf]
  %v543 = vld [vmem:[%s225 + $0x18] sm:$0xf]
  %v544 = vld [vmem:[%s225 + $0x1c] sm:$0xf]
  %v545 = vld [vmem:[%s225 + $0x20] sm:$0xf]
  %v546 = vld [vmem:[%s225 + $0x24] sm:$0xf]
  %v547 = vld [vmem:[%s225 + $0x28] sm:$0xf]
  %v548 = vld [vmem:[%s225 + $0x2c] sm:$0xf]
  %v549 = vld [vmem:[%s225 + $0x30] sm:$0xf]
  %v550 = vld [vmem:[%s225 + $0x34] sm:$0xf]
  %v551 = vld [vmem:[%s225 + $0x38] sm:$0xf]
  %v552 = vld [vmem:[%s225 + $0x3c] sm:$0xf]
  %v553 = vrot.slane %v397, 1
  %v554 = vrot.slane %v398, 1
  %v555 = vsel %vm242, %v553, %v554
  %v573 = vunpack.c.l.b16 %v537
  %v574 = vunpack.c.l.b16 %v538
  %v575 = vunpack.c.l.b16 %v539
  %v576 = vunpack.c.l.b16 %v540
  %v577 = vunpack.c.l.b16 %v541
  %v578 = vunpack.c.l.b16 %v542
  %v579 = vunpack.c.l.b16 %v543
  %v580 = vunpack.c.l.b16 %v544
  %v581 = vunpack.c.l.b16 %v545
  %v582 = vunpack.c.l.b16 %v546
  %v583 = vunpack.c.l.b16 %v547
  %v584 = vunpack.c.l.b16 %v548
  %v585 = vunpack.c.l.b16 %v549
  %v586 = vunpack.c.l.b16 %v550
  %v587 = vunpack.c.l.b16 %v551
  %v588 = vunpack.c.l.b16 %v552
  %v589 = vpack.c.b16 %v574, %v573
  %v590 = vpack.c.b16 %v576, %v575
  %v591 = vpack.c.b16 %v578, %v577
  %v592 = vpack.c.b16 %v580, %v579
  %v593 = vpack.c.b16 %v582, %v581
  %v594 = vpack.c.b16 %v584, %v583
  %v595 = vpack.c.b16 %v586, %v585
  %v596 = vpack.c.b16 %v588, %v587
  %605 = vmatpush.bf16.msra.mxu0 %v596
  %606 = vmatpush.bf16.msra.mxu0 %v595
  %607 = vmatpush.bf16.msra.mxu0 %v594
  %608 = vmatpush.bf16.msra.mxu0 %v593
  %609 = vmatpush.bf16.msra.mxu0 %v592
  %610 = vmatpush.bf16.msra.mxu0 %v591
  %611 = vmatpush.bf16.msra.mxu0 %v590
  %612 = vmatpush.bf16.msra.mxu0 %v589
  %613 = vmatmul.bf16.gmra.mxu0 %v555
  %v614 = vpop.f32.mrf.mxu0
  %v615 = vadd.f32 0.0, %v614
  %v616 = vpop.f32.mrf.mxu0
  %v617 = vadd.f32 0.0, %v616
  %618 = vdwg.mxu0
  %v619 = vadd.f32 %v533, %v615
  %v620 = vadd.f32 %v535, %v617
  %v621 = vadd.f32 %v619, %v620
  %v622 = vrot.slane %v621, 4
  %v623 = vadd.f32 %v621, %v622
  %v624 = vrot.slane %v623, 2
  %v625 = vadd.f32 %v623, %v624
  %v626 = vrot.slane %v625, 1
  %v627 = vadd.f32 %v625, %v626
  %v628 = vmul.f32 %v619, %v619
  %v629 = vmul.f32 %v620, %v620
  %v630 = vadd.f32 %v628, %v629
  %v631 = vrot.slane %v630, 4
  %v632 = vadd.f32 %v630, %v631
  %v633 = vrot.slane %v632, 2
  %v634 = vadd.f32 %v632, %v633
  %v635 = vrot.slane %v634, 1
  %v636 = vadd.f32 %v634, %v635
  %v637 = vsel %vm327, %v627, %v636
  %s638 = scalar_lea.vmem %s4, 16
  %639 = vst [vmem:[%s638] sm:$0xff] %v619
  %640 = vst [vmem:[%s638 + $0x8] sm:$0xff] %v620
  %s641 = scalar_lea.vmem %s5, 2
  %642 = vst [vmem:[%s641] sm:$0x3] %v637
  // Predicated region
  $region18: #{_forward.3} parent=0 // pred_check
    _
  $region19: #{_forward.3} parent=0 // pred_check_branch
    %644 = sbr.rel (0) target = $region21
  $region20: #{_forward.3} parent=0 // pred_region
    _
  $region21: #{_forward.3} parent=0 // pred_fallthru
    _
  // Predicated region
  $region22: #{_forward.3} parent=0 // pred_check
    _
  $region23: #{_forward.3} parent=0 // pred_check_branch
    %646 = sbr.rel (0) target = $region25
  $region24: #{_forward.3} parent=0 // pred_region
    _
  $region25: #{_forward.3} parent=0 // pred_fallthru
    _
  // Predicated region
  $region26: #{_forward.3} parent=0 // pred_check
    _
  $region27: #{_forward.3} parent=0 // pred_check_branch
    %648 = sbr.rel (0) target = $region29
  $region28: #{_forward.3} parent=0 // pred_region
    _
  $region29: #{_forward.3} parent=0 // pred_fallthru
    _
  // Predicated region
  $region30: #{_forward.3} parent=0 // pred_check
    _
  $region31: #{_forward.3} parent=0 // pred_check_branch
    %650 = sbr.rel (0) target = $region33
  $region32: #{_forward.3} parent=0 // pred_region
    _
  $region33: #{_forward.3} parent=0 // pred_fallthru
    _

</llo_original>
